<compile_context>
chip_gen: v7x
topology: tpu7x:2x2x1
jax: 0.10.0
libtpu: 0.0.40
codegen_flags: <defaults>
</compile_context>

<pallas_src>
import functools

import jax
import jax.numpy as jnp
from jax.experimental import pallas as pl
from jax.experimental.pallas import tpu as pltpu

KH = KW = 3  # topology CONV_8_3_1_1: kernel=3, stride=1, padding=1


# ------------------------------ fused kernel ------------------------------- #

def _fused_forward_kernel(x_ref, wc_ref, bc_ref, w1_ref, b1_ref, w2_ref, b2_ref,
                          out_ref, *, batch, out_ch, height, width):
    """conv3x3(p=1,s=1)+bias+ReLU -> maxpool2x2 -> flatten -> fc1+tanh -> fc2 (none).

    Layouts (all VMEM resident):
      x_ref   : (batch*in_ch, lf) f32   row b*in_ch+c of the zero-padded image,
                                        flattened row-major with padded row width wp.
      wc_ref  : (batch*out_ch, 9*batch*in_ch) bf16  block-diag conv weight,
                                        rows oc*batch+b, cols k*(B*C)+b*in_ch+c.
      bc_ref  : (batch*out_ch, 1) f32   conv bias, rows oc*batch+b.
      w1_ref  : (out_ch, rpb, hidden) bf16  fc1 weight with the max-pool compaction
                                        gather folded in (zeros at non-pooled cols).
      b1_ref  : (1, hidden) f32
      w2_ref  : (hidden, classes) f32   fc2 weight pre-transposed to (K, N).
      b2_ref  : (1, classes) f32
      out_ref : (batch, classes) f32
    """
    wp = width + 2                       # padded row width
    rpb = height * wp                    # logical flat conv/pool slab width
    rpbe = rpb + wp + 2                  # extra cols keep the pooling slices in-bounds

    x_all = x_ref[...]                                            # (B*C, lf) f32

    # ---- conv: im2col via 9 static lane-shifted windows, ONE bf16 MXU matmul ----
    wins = [x_all[:, kh * wp + kw: kh * wp + kw + rpbe]
            for kh in range(KH) for kw in range(KW)]              # 9 x (B*C, rpbe)
    stacked = jnp.concatenate(wins, axis=0).astype(jnp.bfloat16)  # (9*B*C, rpbe)
    conv = jnp.dot(wc_ref[...], stacked,
                   preferred_element_type=jnp.float32)            # (B*OC, rpbe) f32
    conv = jnp.maximum(conv + bc_ref[...], 0.0)                   # bias + ReLU
    # TrainingHook(train_mode='DRTP') is identity in the forward pass.
    # Columns with (padded) w >= width are junk; they are never read below because
    # the pooling windows only touch columns (2*ph+dh)*wp + (2*pw+dw) with
    # 2*pw+dw <= width-1, and the fc1 weight is zero everywhere else.

    # ---- 2x2 / stride-2 maxpool: elementwise max of 4 shifted windows ----
    m2 = jnp.maximum(jnp.maximum(conv[:, 0:rpb], conv[:, 1:rpb + 1]),
                     jnp.maximum(conv[:, wp:wp + rpb], conv[:, wp + 1:wp + 1 + rpb]))
    m2 = m2.astype(jnp.bfloat16)                                  # (B*OC, rpb)

    # ---- fc1 (+tanh): pool-compaction gather folded into w1_ref; fc2 epilogue ----
    acc = None
    for oc in range(out_ch):
        part = jnp.dot(m2[oc * batch:(oc + 1) * batch, :], w1_ref[oc],
                       preferred_element_type=jnp.float32)        # (batch, hidden)
        acc = part if acc is None else acc + part
    h1 = jnp.tanh(acc + b1_ref[...])                              # hidden_act = 'tanh'

    logits = jnp.dot(h1, w2_ref[...],
                     preferred_element_type=jnp.float32) + b2_ref[...]
    out_ref[...] = logits.astype(out_ref.dtype)                   # output_act = 'none'


# ------------------------------ parameters --------------------------------- #

def init_params(key, input_channels=4, input_size=16, conv_oc=8, fc_hidden=32,
                label_features=2):
    """PyTorch-layout parameters of NetworkBuilder('CONV_8_3_1_1_FC_32_FC_2', ...)."""
    ks = jax.random.split(key, 6)
    pooled = input_size // 2            # conv keeps the spatial size, pool halves it
    fc1_in = conv_oc * pooled * pooled
    return {
        "conv_w": 0.1 * jax.random.normal(ks[0], (conv_oc, input_channels, KH, KW), jnp.float32),
        "conv_b": 0.1 * jax.random.normal(ks[1], (conv_oc,), jnp.float32),
        "fc1_w": 0.1 * jax.random.normal(ks[2], (fc_hidden, fc1_in), jnp.float32),
        "fc1_b": 0.1 * jax.random.normal(ks[3], (fc_hidden,), jnp.float32),
        "fc2_w": 0.1 * jax.random.normal(ks[4], (label_features, fc_hidden), jnp.float32),
        "fc2_b": 0.1 * jax.random.normal(ks[5], (label_features,), jnp.float32),
    }


def prepare_params(pt_params, batch, input_size=16):
    """One-time re-layout into kernel-friendly shapes (no per-call transposes)."""
    conv_w = pt_params["conv_w"].astype(jnp.float32)       # (OC, C, 3, 3)
    out_ch, in_ch = conv_w.shape[0], conv_w.shape[1]
    height = width = input_size
    wp = width + 2
    rpb = height * wp

    # Conv weight flattened over the 9 taps, block-diagonal over the batch:
    # rows oc*batch + b, cols k*(batch*in_ch) + b*in_ch + c.
    wc = jnp.zeros((out_ch * batch, KH * KW * batch * in_ch), jnp.float32)
    for b in range(batch):
        for k in range(KH * KW):
            kh, kw = divmod(k, KW)
            col0 = k * batch * in_ch + b * in_ch
            wc = wc.at[b::batch, col0:col0 + in_ch].set(conv_w[:, :, kh, kw])
    bc = jnp.repeat(pt_params["conv_b"].astype(jnp.float32), batch).reshape(out_ch * batch, 1)

    # fc1 weight with the max-pool compaction gather folded in:
    # w1fold[oc, 2*ph*wp + 2*pw, :] = fc1_w[:, oc*(H/2*W/2) + ph*(W/2) + pw], zeros elsewhere.
    ph_n, pw_n = height // 2, width // 2
    hidden = pt_params["fc1_w"].shape[0]
    w1t = pt_params["fc1_w"].astype(jnp.float32).T.reshape(out_ch, ph_n, pw_n, hidden)
    cols = (2 * jnp.arange(ph_n)[:, None] * wp + 2 * jnp.arange(pw_n)[None, :]).reshape(-1)
    w1fold = jnp.zeros((out_ch, rpb, hidden), jnp.float32)
    w1fold = w1fold.at[:, cols, :].set(w1t.reshape(out_ch, ph_n * pw_n, hidden))

    return {
        "conv_w": wc.astype(jnp.bfloat16),                       # (B*OC, 9*B*C) bf16
        "conv_b": bc,                                            # (B*OC, 1) f32
        "fc1_wfold": w1fold.astype(jnp.bfloat16),                # (OC, rpb, hidden) bf16
        "fc1_b": pt_params["fc1_b"].astype(jnp.float32).reshape(1, -1),
        "fc2_wT": pt_params["fc2_w"].astype(jnp.float32).T,      # (hidden, classes) f32
        "fc2_b": pt_params["fc2_b"].astype(jnp.float32).reshape(1, -1),
    }


# --------------------------- NetworkBuilder forward ------------------------- #

def network_forward(params, x, labels):
    """Forward pass of NetworkBuilder('CONV_8_3_1_1_FC_32_FC_2', ...).

    `labels` only feed TrainingHook's DRTP backward path; the forward output is
    independent of them.  apply_softmax only updates the training-time self.y buffer,
    never the returned logits.
    """
    del labels  # TrainingHook forward == identity.
    # TODO(synk): dropout != 0 (training-mode nn.Dropout) is not implemented.

    batch, in_ch, height, width = x.shape
    assert height % 2 == 0 and width % 2 == 0

    wp = width + 2
    rpb = height * wp
    rpbe = rpb + wp + 2
    out_ch = params["conv_b"].shape[0] // batch
    hidden = params["fc1_wfold"].shape[2]
    classes = params["fc2_wT"].shape[1]
    assert params["fc1_wfold"].shape[1] == rpb
    # Pool windows read conv columns up to (H-1)*wp + (W-1) (all valid, non-junk
    # positions) — tie the slab widths together so nothing reads out of bounds:
    assert (height - 1) * wp + (width - 1) < rpbe

    # Zero-pad (conv padding=1) and flatten row-major; the extra bottom rows keep
    # the widest in-kernel window (rpbe cols, max shift 2*wp+2) inside the row slab.
    xp = jnp.pad(x, ((0, 0), (0, 0), (1, 3), (1, 1)))
    lf = (height + 4) * wp
    assert lf >= rpbe + 2 * wp + 2
    x_flat = xp.reshape(batch * in_ch, lf)

    kernel = functools.partial(
        _fused_forward_kernel,
        batch=batch, out_ch=out_ch, height=height, width=width)

    return pl.pallas_call(
        kernel,
        out_shape=jax.ShapeDtypeStruct((batch, classes), jnp.float32),
        grid=(1,),
        in_specs=[
            pl.BlockSpec((batch * in_ch, lf), lambda i: (0, 0)),
            pl.BlockSpec((batch * out_ch, KH * KW * batch * in_ch), lambda i: (0, 0)),
            pl.BlockSpec((batch * out_ch, 1), lambda i: (0, 0)),
            pl.BlockSpec((out_ch, rpb, hidden), lambda i: (0, 0, 0)),
            pl.BlockSpec((1, hidden), lambda i: (0, 0)),
            pl.BlockSpec((hidden, classes), lambda i: (0, 0)),
            pl.BlockSpec((1, classes), lambda i: (0, 0)),
        ],
        out_specs=pl.BlockSpec((batch, classes), lambda i: (0, 0)),
        compiler_params=pltpu.CompilerParams(dimension_semantics=("arbitrary",)),
    )(x_flat, params["conv_w"], params["conv_b"],
      params["fc1_wfold"], params["fc1_b"], params["fc2_wT"], params["fc2_b"])


# ------------------------------ reference & main ---------------------------- #

def reference_forward(pt_params, x):
    """Pure-JAX reference of the PyTorch module (used only for the self-check)."""
    conv = jax.lax.conv_general_dilated(
        x, pt_params["conv_w"], window_strides=(1, 1), padding=((1, 1), (1, 1)),
        dimension_numbers=("NCHW", "OIHW", "NCHW"),
        precision=jax.lax.Precision.HIGHEST)
    conv = jnp.maximum(conv + pt_params["conv_b"].reshape(1, -1, 1, 1), 0.0)
    b, oc, hh, ww = conv.shape
    pooled = jnp.max(conv.reshape(b, oc, hh // 2, 2, ww // 2, 2), axis=(3, 5))
    flat = pooled.reshape(b, -1)
    h1 = jnp.tanh(jnp.dot(flat, pt_params["fc1_w"].T,
                          precision=jax.lax.Precision.HIGHEST) + pt_params["fc1_b"])
    return jnp.dot(h1, pt_params["fc2_w"].T,
                   precision=jax.lax.Precision.HIGHEST) + pt_params["fc2_b"]


if __name__ == "__main__":
    key = jax.random.PRNGKey(0)
    k_params, k_x, k_lab = jax.random.split(key, 3)

    batch, channels, size, label_features = 2, 4, 16, 2
    pt_params = init_params(k_params, input_channels=channels, input_size=size,
                            label_features=label_features)
    params = prepare_params(pt_params, batch=batch, input_size=size)

    x = jax.random.normal(k_x, (batch, channels, size, size), jnp.float32)
    labels = jax.nn.one_hot(
        jax.random.randint(k_lab, (batch,), 0, label_features), label_features
    ).astype(jnp.float32)

    fwd = jax.jit(network_forward)
    out = jax.block_until_ready(fwd(params, x, labels))
    assert out.shape == (batch, label_features), out.shape

    ref = reference_forward(pt_params, x)
    max_err = float(jnp.max(jnp.abs(out - ref)))
    assert max_err < 5e-2, f"kernel/reference mismatch: {max_err}"
    print("KERNEL_OK")
</pallas_src>

<mosaic_0001>
module attributes {stable_mosaic.version = 11 : i64} {
  func.func @_fused_forward_kernel(%arg0: i32, %arg1: memref<8x360xf32, #tpu.memory_space<vmem>>, %arg2: memref<16x72xbf16, #tpu.memory_space<vmem>>, %arg3: memref<16x1xf32, #tpu.memory_space<vmem>>, %arg4: memref<8x288x32xbf16, #tpu.memory_space<vmem>>, %arg5: memref<1x32xf32, #tpu.memory_space<vmem>>, %arg6: memref<32x2xf32, #tpu.memory_space<vmem>>, %arg7: memref<1x2xf32, #tpu.memory_space<vmem>>, %arg8: memref<2x2xf32, #tpu.memory_space<vmem>>) attributes {dimension_semantics = [#tpu.dimension_semantics<arbitrary>], iteration_bounds = array<i64: 1>, scalar_prefetch = 0 : i64, scratch_operands = 0 : i64, tpu.core_type = #tpu.core_type<tc>, window_params = [{pipeline_mode = #tpu.pipeline_mode<synchronous>, transform_indices = @transform_0, window_bounds = array<i64: 8, 360>}, {pipeline_mode = #tpu.pipeline_mode<synchronous>, transform_indices = @transform_1, window_bounds = array<i64: 16, 72>}, {pipeline_mode = #tpu.pipeline_mode<synchronous>, transform_indices = @transform_2, window_bounds = array<i64: 16, 1>}, {pipeline_mode = #tpu.pipeline_mode<synchronous>, transform_indices = @transform_3, window_bounds = array<i64: 8, 288, 32>}, {pipeline_mode = #tpu.pipeline_mode<synchronous>, transform_indices = @transform_4, window_bounds = array<i64: 1, 32>}, {pipeline_mode = #tpu.pipeline_mode<synchronous>, transform_indices = @transform_5, window_bounds = array<i64: 32, 2>}, {pipeline_mode = #tpu.pipeline_mode<synchronous>, transform_indices = @transform_6, window_bounds = array<i64: 1, 2>}, {pipeline_mode = #tpu.pipeline_mode<synchronous>, transform_indices = @transform_7, window_bounds = array<i64: 2, 2>}]} {
    %c0 = arith.constant 0 : index
    %c0_0 = arith.constant 0 : index
    %0 = vector.load %arg1[%c0, %c0_0] : memref<8x360xf32, #tpu.memory_space<vmem>>, vector<8x360xf32>
    %1 = vector.extract_strided_slice %0 {offsets = [0, 0], sizes = [8, 308], strides = [1, 1]} : vector<8x360xf32> to vector<8x308xf32>
    %2 = vector.extract_strided_slice %0 {offsets = [0, 1], sizes = [8, 308], strides = [1, 1]} : vector<8x360xf32> to vector<8x308xf32>
    %3 = vector.extract_strided_slice %0 {offsets = [0, 2], sizes = [8, 308], strides = [1, 1]} : vector<8x360xf32> to vector<8x308xf32>
    %4 = vector.extract_strided_slice %0 {offsets = [0, 18], sizes = [8, 308], strides = [1, 1]} : vector<8x360xf32> to vector<8x308xf32>
    %5 = vector.extract_strided_slice %0 {offsets = [0, 19], sizes = [8, 308], strides = [1, 1]} : vector<8x360xf32> to vector<8x308xf32>
    %6 = vector.extract_strided_slice %0 {offsets = [0, 20], sizes = [8, 308], strides = [1, 1]} : vector<8x360xf32> to vector<8x308xf32>
    %7 = vector.extract_strided_slice %0 {offsets = [0, 36], sizes = [8, 308], strides = [1, 1]} : vector<8x360xf32> to vector<8x308xf32>
    %8 = vector.extract_strided_slice %0 {offsets = [0, 37], sizes = [8, 308], strides = [1, 1]} : vector<8x360xf32> to vector<8x308xf32>
    %9 = vector.extract_strided_slice %0 {offsets = [0, 38], sizes = [8, 308], strides = [1, 1]} : vector<8x360xf32> to vector<8x308xf32>
    %10 = tpu.concatenate %1, %2, %3, %4, %5, %6, %7, %8, %9 in 0 : vector<8x308xf32>, vector<8x308xf32>, vector<8x308xf32>, vector<8x308xf32>, vector<8x308xf32>, vector<8x308xf32>, vector<8x308xf32>, vector<8x308xf32>, vector<8x308xf32> -> vector<72x308xf32>
    %11 = arith.truncf %10 : vector<72x308xf32> to vector<72x308xbf16>
    %c0_1 = arith.constant 0 : index
    %c0_2 = arith.constant 0 : index
    %12 = vector.load %arg2[%c0_1, %c0_2] : memref<16x72xbf16, #tpu.memory_space<vmem>>, vector<16x72xbf16>
    %cst = arith.constant dense<0.000000e+00> : vector<16x308xf32>
    %13 = tpu.matmul %12, %11, %cst {dimension_numbers = #tpu.dot_dimension_numbers<[1], [0], [0], [1], [0, 0, 1, 1], [], []>} : vector<16x72xbf16>, vector<72x308xbf16>, vector<16x308xf32> -> vector<16x308xf32>
    %c0_3 = arith.constant 0 : index
    %c0_4 = arith.constant 0 : index
    %14 = vector.load %arg3[%c0_3, %c0_4] : memref<16x1xf32, #tpu.memory_space<vmem>>, vector<16x1xf32>
    %15 = vector.broadcast %14 : vector<16x1xf32> to vector<16x308xf32>
    %16 = arith.addf %13, %15 : vector<16x308xf32>
    %cst_5 = arith.constant 0.000000e+00 : f32
    %17 = vector.broadcast %cst_5 : f32 to vector<16x308xf32>
    %18 = arith.maximumf %16, %17 : vector<16x308xf32>
    %19 = vector.extract_strided_slice %18 {offsets = [0, 0], sizes = [16, 288], strides = [1, 1]} : vector<16x308xf32> to vector<16x288xf32>
    %20 = vector.extract_strided_slice %18 {offsets = [0, 1], sizes = [16, 288], strides = [1, 1]} : vector<16x308xf32> to vector<16x288xf32>
    %21 = arith.maximumf %19, %20 : vector<16x288xf32>
    %22 = vector.extract_strided_slice %18 {offsets = [0, 18], sizes = [16, 288], strides = [1, 1]} : vector<16x308xf32> to vector<16x288xf32>
    %23 = vector.extract_strided_slice %18 {offsets = [0, 19], sizes = [16, 288], strides = [1, 1]} : vector<16x308xf32> to vector<16x288xf32>
    %24 = arith.maximumf %22, %23 : vector<16x288xf32>
    %25 = arith.maximumf %21, %24 : vector<16x288xf32>
    %26 = arith.truncf %25 : vector<16x288xf32> to vector<16x288xbf16>
    %27 = vector.extract_strided_slice %26 {offsets = [0, 0], sizes = [2, 288], strides = [1, 1]} : vector<16x288xbf16> to vector<2x288xbf16>
    %c0_6 = arith.constant 0 : index
    %c0_7 = arith.constant 0 : index
    %c0_8 = arith.constant 0 : index
    %28 = vector.load %arg4[%c0_6, %c0_7, %c0_8] : memref<8x288x32xbf16, #tpu.memory_space<vmem>>, vector<1x288x32xbf16>
    %29 = vector.shape_cast %28 : vector<1x288x32xbf16> to vector<288x32xbf16>
    %cst_9 = arith.constant dense<0.000000e+00> : vector<2x32xf32>
    %30 = tpu.matmul %27, %29, %cst_9 {dimension_numbers = #tpu.dot_dimension_numbers<[1], [0], [0], [1], [0, 0, 1, 1], [], []>} : vector<2x288xbf16>, vector<288x32xbf16>, vector<2x32xf32> -> vector<2x32xf32>
    %31 = vector.extract_strided_slice %26 {offsets = [2, 0], sizes = [2, 288], strides = [1, 1]} : vector<16x288xbf16> to vector<2x288xbf16>
    %c1 = arith.constant 1 : index
    %c0_10 = arith.constant 0 : index
    %c0_11 = arith.constant 0 : index
    %32 = vector.load %arg4[%c1, %c0_10, %c0_11] : memref<8x288x32xbf16, #tpu.memory_space<vmem>>, vector<1x288x32xbf16>
    %33 = vector.shape_cast %32 : vector<1x288x32xbf16> to vector<288x32xbf16>
    %cst_12 = arith.constant dense<0.000000e+00> : vector<2x32xf32>
    %34 = tpu.matmul %31, %33, %cst_12 {dimension_numbers = #tpu.dot_dimension_numbers<[1], [0], [0], [1], [0, 0, 1, 1], [], []>} : vector<2x288xbf16>, vector<288x32xbf16>, vector<2x32xf32> -> vector<2x32xf32>
    %35 = arith.addf %30, %34 : vector<2x32xf32>
    %36 = vector.extract_strided_slice %26 {offsets = [4, 0], sizes = [2, 288], strides = [1, 1]} : vector<16x288xbf16> to vector<2x288xbf16>
    %c2 = arith.constant 2 : index
    %c0_13 = arith.constant 0 : index
    %c0_14 = arith.constant 0 : index
    %37 = vector.load %arg4[%c2, %c0_13, %c0_14] : memref<8x288x32xbf16, #tpu.memory_space<vmem>>, vector<1x288x32xbf16>
    %38 = vector.shape_cast %37 : vector<1x288x32xbf16> to vector<288x32xbf16>
    %cst_15 = arith.constant dense<0.000000e+00> : vector<2x32xf32>
    %39 = tpu.matmul %36, %38, %cst_15 {dimension_numbers = #tpu.dot_dimension_numbers<[1], [0], [0], [1], [0, 0, 1, 1], [], []>} : vector<2x288xbf16>, vector<288x32xbf16>, vector<2x32xf32> -> vector<2x32xf32>
    %40 = arith.addf %35, %39 : vector<2x32xf32>
    %41 = vector.extract_strided_slice %26 {offsets = [6, 0], sizes = [2, 288], strides = [1, 1]} : vector<16x288xbf16> to vector<2x288xbf16>
    %c3 = arith.constant 3 : index
    %c0_16 = arith.constant 0 : index
    %c0_17 = arith.constant 0 : index
    %42 = vector.load %arg4[%c3, %c0_16, %c0_17] : memref<8x288x32xbf16, #tpu.memory_space<vmem>>, vector<1x288x32xbf16>
    %43 = vector.shape_cast %42 : vector<1x288x32xbf16> to vector<288x32xbf16>
    %cst_18 = arith.constant dense<0.000000e+00> : vector<2x32xf32>
    %44 = tpu.matmul %41, %43, %cst_18 {dimension_numbers = #tpu.dot_dimension_numbers<[1], [0], [0], [1], [0, 0, 1, 1], [], []>} : vector<2x288xbf16>, vector<288x32xbf16>, vector<2x32xf32> -> vector<2x32xf32>
    %45 = arith.addf %40, %44 : vector<2x32xf32>
    %46 = vector.extract_strided_slice %26 {offsets = [8, 0], sizes = [2, 288], strides = [1, 1]} : vector<16x288xbf16> to vector<2x288xbf16>
    %c4 = arith.constant 4 : index
    %c0_19 = arith.constant 0 : index
    %c0_20 = arith.constant 0 : index
    %47 = vector.load %arg4[%c4, %c0_19, %c0_20] : memref<8x288x32xbf16, #tpu.memory_space<vmem>>, vector<1x288x32xbf16>
    %48 = vector.shape_cast %47 : vector<1x288x32xbf16> to vector<288x32xbf16>
    %cst_21 = arith.constant dense<0.000000e+00> : vector<2x32xf32>
    %49 = tpu.matmul %46, %48, %cst_21 {dimension_numbers = #tpu.dot_dimension_numbers<[1], [0], [0], [1], [0, 0, 1, 1], [], []>} : vector<2x288xbf16>, vector<288x32xbf16>, vector<2x32xf32> -> vector<2x32xf32>
    %50 = arith.addf %45, %49 : vector<2x32xf32>
    %51 = vector.extract_strided_slice %26 {offsets = [10, 0], sizes = [2, 288], strides = [1, 1]} : vector<16x288xbf16> to vector<2x288xbf16>
    %c5 = arith.constant 5 : index
    %c0_22 = arith.constant 0 : index
    %c0_23 = arith.constant 0 : index
    %52 = vector.load %arg4[%c5, %c0_22, %c0_23] : memref<8x288x32xbf16, #tpu.memory_space<vmem>>, vector<1x288x32xbf16>
    %53 = vector.shape_cast %52 : vector<1x288x32xbf16> to vector<288x32xbf16>
    %cst_24 = arith.constant dense<0.000000e+00> : vector<2x32xf32>
    %54 = tpu.matmul %51, %53, %cst_24 {dimension_numbers = #tpu.dot_dimension_numbers<[1], [0], [0], [1], [0, 0, 1, 1], [], []>} : vector<2x288xbf16>, vector<288x32xbf16>, vector<2x32xf32> -> vector<2x32xf32>
    %55 = arith.addf %50, %54 : vector<2x32xf32>
    %56 = vector.extract_strided_slice %26 {offsets = [12, 0], sizes = [2, 288], strides = [1, 1]} : vector<16x288xbf16> to vector<2x288xbf16>
    %c6 = arith.constant 6 : index
    %c0_25 = arith.constant 0 : index
    %c0_26 = arith.constant 0 : index
    %57 = vector.load %arg4[%c6, %c0_25, %c0_26] : memref<8x288x32xbf16, #tpu.memory_space<vmem>>, vector<1x288x32xbf16>
    %58 = vector.shape_cast %57 : vector<1x288x32xbf16> to vector<288x32xbf16>
    %cst_27 = arith.constant dense<0.000000e+00> : vector<2x32xf32>
    %59 = tpu.matmul %56, %58, %cst_27 {dimension_numbers = #tpu.dot_dimension_numbers<[1], [0], [0], [1], [0, 0, 1, 1], [], []>} : vector<2x288xbf16>, vector<288x32xbf16>, vector<2x32xf32> -> vector<2x32xf32>
    %60 = arith.addf %55, %59 : vector<2x32xf32>
    %61 = vector.extract_strided_slice %26 {offsets = [14, 0], sizes = [2, 288], strides = [1, 1]} : vector<16x288xbf16> to vector<2x288xbf16>
    %c7 = arith.constant 7 : index
    %c0_28 = arith.constant 0 : index
    %c0_29 = arith.constant 0 : index
    %62 = vector.load %arg4[%c7, %c0_28, %c0_29] : memref<8x288x32xbf16, #tpu.memory_space<vmem>>, vector<1x288x32xbf16>
    %63 = vector.shape_cast %62 : vector<1x288x32xbf16> to vector<288x32xbf16>
    %cst_30 = arith.constant dense<0.000000e+00> : vector<2x32xf32>
    %64 = tpu.matmul %61, %63, %cst_30 {dimension_numbers = #tpu.dot_dimension_numbers<[1], [0], [0], [1], [0, 0, 1, 1], [], []>} : vector<2x288xbf16>, vector<288x32xbf16>, vector<2x32xf32> -> vector<2x32xf32>
    %65 = arith.addf %60, %64 : vector<2x32xf32>
    %c0_31 = arith.constant 0 : index
    %c0_32 = arith.constant 0 : index
    %66 = vector.load %arg5[%c0_31, %c0_32] : memref<1x32xf32, #tpu.memory_space<vmem>>, vector<1x32xf32>
    %67 = vector.broadcast %66 : vector<1x32xf32> to vector<2x32xf32>
    %68 = arith.addf %65, %67 : vector<2x32xf32>
    %69 = math.tanh %68 : vector<2x32xf32>
    %c0_33 = arith.constant 0 : index
    %c0_34 = arith.constant 0 : index
    %70 = vector.load %arg6[%c0_33, %c0_34] : memref<32x2xf32, #tpu.memory_space<vmem>>, vector<32x2xf32>
    %cst_35 = arith.constant dense<0.000000e+00> : vector<2x2xf32>
    %71 = tpu.matmul %69, %70, %cst_35 {dimension_numbers = #tpu.dot_dimension_numbers<[1], [0], [0], [1], [0, 0, 1, 1], [], []>} : vector<2x32xf32>, vector<32x2xf32>, vector<2x2xf32> -> vector<2x2xf32>
    %c0_36 = arith.constant 0 : index
    %c0_37 = arith.constant 0 : index
    %72 = vector.load %arg7[%c0_36, %c0_37] : memref<1x2xf32, #tpu.memory_space<vmem>>, vector<1x2xf32>
    %73 = vector.broadcast %72 : vector<1x2xf32> to vector<2x2xf32>
    %74 = arith.addf %71, %73 : vector<2x2xf32>
    %c0_38 = arith.constant 0 : index
    %c0_39 = arith.constant 0 : index
    %75 = vector.load %arg8[%c0_38, %c0_39] : memref<2x2xf32, #tpu.memory_space<vmem>>, vector<2x2xf32>
    tpu.vector_store %arg8[%c0_38, %c0_39], %74 {strides = array<i32>} : memref<2x2xf32, #tpu.memory_space<vmem>>, vector<2x2xf32>,
    return
  }
  func.func @transform_0(%arg0: i32) -> (i32, i32) {
    %c0_i32 = arith.constant 0 : i32
    %c0_i32_0 = arith.constant 0 : i32
    %c0_i32_1 = arith.constant 0 : i32
    return %c0_i32, %c0_i32_0 : i32, i32
  }
  func.func @transform_1(%arg0: i32) -> (i32, i32) {
    %c0_i32 = arith.constant 0 : i32
    %c0_i32_0 = arith.constant 0 : i32
    %c0_i32_1 = arith.constant 0 : i32
    return %c0_i32, %c0_i32_0 : i32, i32
  }
  func.func @transform_2(%arg0: i32) -> (i32, i32) {
    %c0_i32 = arith.constant 0 : i32
    %c0_i32_0 = arith.constant 0 : i32
    %c0_i32_1 = arith.constant 0 : i32
    return %c0_i32, %c0_i32_0 : i32, i32
  }
  func.func @transform_3(%arg0: i32) -> (i32, i32, i32) {
    %c0_i32 = arith.constant 0 : i32
    %c0_i32_0 = arith.constant 0 : i32
    %c0_i32_1 = arith.constant 0 : i32
    %c0_i32_2 = arith.constant 0 : i32
    return %c0_i32, %c0_i32_0, %c0_i32_1 : i32, i32, i32
  }
  func.func @transform_4(%arg0: i32) -> (i32, i32) {
    %c0_i32 = arith.constant 0 : i32
    %c0_i32_0 = arith.constant 0 : i32
    %c0_i32_1 = arith.constant 0 : i32
    return %c0_i32, %c0_i32_0 : i32, i32
  }
  func.func @transform_5(%arg0: i32) -> (i32, i32) {
    %c0_i32 = arith.constant 0 : i32
    %c0_i32_0 = arith.constant 0 : i32
    %c0_i32_1 = arith.constant 0 : i32
    return %c0_i32, %c0_i32_0 : i32, i32
  }
  func.func @transform_6(%arg0: i32) -> (i32, i32) {
    %c0_i32 = arith.constant 0 : i32
    %c0_i32_0 = arith.constant 0 : i32
    %c0_i32_1 = arith.constant 0 : i32
    return %c0_i32, %c0_i32_0 : i32, i32
  }
  func.func @transform_7(%arg0: i32) -> (i32, i32) {
    %c0_i32 = arith.constant 0 : i32
    %c0_i32_0 = arith.constant 0 : i32
    %c0_i32_1 = arith.constant 0 : i32
    return %c0_i32, %c0_i32_0 : i32, i32
  }
}

</mosaic_0001>

<llo_original>
// kernel: network_forward.1
$region0: #{network_forward.1}
  #allocation0 [shape = 'u32[]', space=smem, size = 0x4, offset = 0x4, fixed_abs, tag = 'smem constant byte address 0x4 - core index']
  #allocation1 [shape = 'u32[144,128]{1,0:T(1,128)}', space=vmem, size = 0x12000, scoped, tag = 'internal scratch']
  %s0 = inlined_call_operand.vmem [shape: f32[8,360], index: 0, kind: input, shape index: {}]
  %s1 = inlined_call_operand.vmem [shape: bf16[16,72], index: 1, kind: input, shape index: {}]
  %s2 = inlined_call_operand.vmem [shape: f32[16,1], index: 2, kind: input, shape index: {}]
  %s3 = inlined_call_operand.vmem [shape: bf16[8,288,32], index: 3, kind: input, shape index: {}]
  %s4 = inlined_call_operand.vmem [shape: f32[1,32], index: 4, kind: input, shape index: {}]
  %s5 = inlined_call_operand.vmem [shape: f32[32,2], index: 5, kind: input, shape index: {}]
  %s6 = inlined_call_operand.vmem [shape: f32[1,2], index: 6, kind: input, shape index: {}]
  %s7 = inlined_call_operand.hbm [shape: f32[2,2], index: 7, kind: output, shape index: {}]
  %s8 = sld [smem:[#allocation0]]
  $region38: #{network_forward.1} parent=0
    _
  %s10 = ssub.s32 1, %s8
  %s11 = scalar_select 0, %s10, %s8
  $region1: #{network_forward.1} parent=0
    #allocation2 [shape = 'u8[1024]{0}', space=vmem, size = 0x400, scoped, tag = 'output window, operand 0, single buffered']
    #allocation3 [shape = 's32[1]{0}', space=sflag, size = 0x4, scoped, tag = 'scoped memory for network_forward.1']
    %12 = vsyncpa [#allocation3], 0
    // Predicated region
    $region2: #{network_forward.1} parent=1 // pred_check
      _
    $region3: #{network_forward.1} parent=1 // pred_check_branch
      %14 = sbr.rel (0) target = $region5
    $region4: #{network_forward.1} parent=1 // pred_region
      _
    $region5: #{network_forward.1} parent=1 // pred_fallthru
      _
    // Predicated region
    $region6: #{network_forward.1} parent=1 // pred_check
      _
    $region7: #{network_forward.1} parent=1 // pred_check_branch
      %16 = sbr.rel (0) target = $region9
    $region8: #{network_forward.1} parent=1 // pred_region
      _
    $region9: #{network_forward.1} parent=1 // pred_fallthru
      _
    // Predicated region
    $region10: #{network_forward.1} parent=1 // pred_check
      _
    $region11: #{network_forward.1} parent=1 // pred_check_branch
      %18 = sbr.rel (0) target = $region13
    $region12: #{network_forward.1} parent=1 // pred_region
      _
    $region13: #{network_forward.1} parent=1 // pred_fallthru
      _
    // Predicated region
    $region14: #{network_forward.1} parent=1 // pred_check
      _
    $region15: #{network_forward.1} parent=1 // pred_check_branch
      %20 = sbr.rel (0) target = $region17
    $region16: #{network_forward.1} parent=1 // pred_region
      _
    $region17: #{network_forward.1} parent=1 // pred_fallthru
      _
    // Predicated region
    $region18: #{network_forward.1} parent=1 // pred_check
      _
    $region19: #{network_forward.1} parent=1 // pred_check_branch
      %22 = sbr.rel (0) target = $region21
    $region20: #{network_forward.1} parent=1 // pred_region
      _
    $region21: #{network_forward.1} parent=1 // pred_fallthru
      _
    // Predicated region
    $region22: #{network_forward.1} parent=1 // pred_check
      _
    $region23: #{network_forward.1} parent=1 // pred_check_branch
      %24 = sbr.rel (0) target = $region25
    $region24: #{network_forward.1} parent=1 // pred_region
      _
    $region25: #{network_forward.1} parent=1 // pred_fallthru
      _
    // Predicated region
    $region26: #{network_forward.1} parent=1 // pred_check
      _
    $region27: #{network_forward.1} parent=1 // pred_check_branch
      %26 = sbr.rel (0) target = $region29
    $region28: #{network_forward.1} parent=1 // pred_region
      _
    $region29: #{network_forward.1} parent=1 // pred_fallthru
      _
    %v28 = vld [vmem:[%s0] sm:$0xff]
    %v29 = vld [vmem:[%s0 + $0x8] sm:$0xff]
    %v30 = vld [vmem:[%s0 + $0x10] sm:$0xff]
    %34 = vrot.lane.b32.xlu0 %v28, 127
    %v35 = vpop.permute.xlu0 %34
    %36 = vrot.lane.b32.xlu0 %v29, 127
    %v37 = vpop.permute.xlu0 %36
    %38 = vrot.lane.b32.xlu0 %v30, 127
    %v39 = vpop.permute.xlu0 %38
    %vm40 = vcmask 1039360
    %v41 = vsel %vm40, %v35, %v37
    %v42 = vsel %vm40, %v37, %v39
    %46 = vrot.lane.b32.xlu0 %v28, 126
    %v47 = vpop.permute.xlu0 %46
    %48 = vrot.lane.b32.xlu0 %v29, 126
    %v49 = vpop.permute.xlu0 %48
    %50 = vrot.lane.b32.xlu0 %v30, 126
    %v51 = vpop.permute.xlu0 %50
    %vm52 = vcmask 1031168
    %v53 = vsel %vm52, %v47, %v49
    %v54 = vsel %vm52, %v49, %v51
    %58 = vrot.lane.b32.xlu0 %v28, 110
    %v59 = vpop.permute.xlu0 %58
    %60 = vrot.lane.b32.xlu0 %v29, 110
    %v61 = vpop.permute.xlu0 %60
    %62 = vrot.lane.b32.xlu0 %v30, 110
    %v63 = vpop.permute.xlu0 %62
    %vm64 = vcmask 900096
    %v65 = vsel %vm64, %v59, %v61
    %v66 = vsel %vm64, %v61, %v63
    %70 = vrot.lane.b32.xlu0 %v28, 109
    %v71 = vpop.permute.xlu0 %70
    %72 = vrot.lane.b32.xlu0 %v29, 109
    %v73 = vpop.permute.xlu0 %72
    %74 = vrot.lane.b32.xlu0 %v30, 109
    %v75 = vpop.permute.xlu0 %74
    %vm76 = vcmask 891904
    %v77 = vsel %vm76, %v71, %v73
    %v78 = vsel %vm76, %v73, %v75
    %82 = vrot.lane.b32.xlu0 %v28, 108
    %v83 = vpop.permute.xlu0 %82
    %84 = vrot.lane.b32.xlu0 %v29, 108
    %v85 = vpop.permute.xlu0 %84
    %86 = vrot.lane.b32.xlu0 %v30, 108
    %v87 = vpop.permute.xlu0 %86
    %vm88 = vcmask 883712
    %v89 = vsel %vm88, %v83, %v85
    %v90 = vsel %vm88, %v85, %v87
    %94 = vrot.lane.b32.xlu0 %v28, 92
    %v95 = vpop.permute.xlu0 %94
    %96 = vrot.lane.b32.xlu0 %v29, 92
    %v97 = vpop.permute.xlu0 %96
    %98 = vrot.lane.b32.xlu0 %v30, 92
    %v99 = vpop.permute.xlu0 %98
    %vm100 = vcmask 752640
    %v101 = vsel %vm100, %v95, %v97
    %v102 = vsel %vm100, %v97, %v99
    %106 = vrot.lane.b32.xlu0 %v28, 91
    %v107 = vpop.permute.xlu0 %106
    %108 = vrot.lane.b32.xlu0 %v29, 91
    %v109 = vpop.permute.xlu0 %108
    %110 = vrot.lane.b32.xlu0 %v30, 91
    %v111 = vpop.permute.xlu0 %110
    %vm112 = vcmask 744448
    %v113 = vsel %vm112, %v107, %v109
    %v114 = vsel %vm112, %v109, %v111
    %118 = vrot.lane.b32.xlu0 %v28, 90
    %v119 = vpop.permute.xlu0 %118
    %120 = vrot.lane.b32.xlu0 %v29, 90
    %v121 = vpop.permute.xlu0 %120
    %122 = vrot.lane.b32.xlu0 %v30, 90
    %v123 = vpop.permute.xlu0 %122
    %vm124 = vcmask 736256
    %v125 = vsel %vm124, %v119, %v121
    %v126 = vsel %vm124, %v121, %v123
    %v130 = vpack.c.bf16 %v41, %v28
    %v131 = vpack.c.bf16 %v42, %v29
    %v132 = vpack.c.bf16 %v39, %v30
    %v133 = vpack.c.bf16 %v65, %v53
    %v134 = vpack.c.bf16 %v66, %v54
    %v135 = vpack.c.bf16 %v63, %v51
    %v136 = vpack.c.bf16 %v89, %v77
    %v137 = vpack.c.bf16 %v90, %v78
    %v138 = vpack.c.bf16 %v87, %v75
    %v139 = vpack.c.bf16 %v113, %v101
    %v140 = vpack.c.bf16 %v114, %v102
    %v141 = vpack.c.bf16 %v111, %v99
    %v142 = vpack.c.bf16 %v125, %v125
    %v143 = vpack.c.bf16 %v126, %v126
    %v144 = vpack.c.bf16 %v123, %v123
    %v145 = vld [vmem:[%s1] sm:$0xf]
    %v146 = vld [vmem:[%s1 + $0x4] sm:$0xf]
    %v147 = vld [vmem:[%s2] sm:$0xff]
    %v148 = vld [vmem:[%s2 + $0x8] sm:$0xff]
    %150 = vset.pattern.permute.xlu0 0
    %151 = vperm.xlu0 %150, %v147
    %v152 = vpop.permute.xlu0 %151
    %155 = vset.pattern.permute.xlu0 0
    %156 = vperm.xlu0 %155, %v148
    %v157 = vpop.permute.xlu0 %156
    %v161 = vunpack.c.l.b16 %v145
    %v162 = vunpack.c.l.b16 %v146
    %v163 = vpack.c.b16 %v162, %v161
    %vm164 = vcmask 588800
    %v166 = vsel %vm164, %v163, 0
    %vm168 = vcmask 1043456
    %v170 = vsel %vm168, %v142, 0
    %v173 = vsel %vm168, %v143, 0
    %v176 = vsel %vm168, %v144, 0
    %178 = vmatprep.subr.bf16.mxu0 %v131
    %179 = vmatpush1.bf16.msra.mxu0 %v130
    %180 = vmatprep.subr.bf16.mxu0 %v134
    %181 = vmatpush1.bf16.msra.mxu0 %v133
    %182 = vmatprep.subr.bf16.mxu0 %v137
    %183 = vmatpush1.bf16.msra.mxu0 %v136
    %184 = vmatprep.subr.bf16.mxu0 %v140
    %185 = vmatpush1.bf16.msra.mxu0 %v139
    %186 = vmatprep.subr.bf16.mxu0 %v173
    %187 = vmatpush1.bf16.msra.mxu0 %v170
    %188 = vmatprep.subr.bf16.mxu0 0
    %189 = vmatpush1.bf16.msra.mxu0 0
    %190 = vmatprep.subr.bf16.mxu0 0
    %191 = vmatpush1.bf16.msra.mxu0 0
    %192 = vmatprep.subr.bf16.mxu0 0
    %193 = vmatpush1.bf16.msra.mxu0 0
    %194 = vmatprep.subr.bf16.mxu0 0
    %195 = vmatpush1.bf16.msra.mxu0 0
    %196 = vmatprep.subr.bf16.mxu0 0
    %197 = vmatpush1.bf16.msra.mxu0 0
    %198 = vmatprep.subr.bf16.mxu0 0
    %199 = vmatpush1.bf16.msra.mxu0 0
    %200 = vmatprep.subr.bf16.mxu0 0
    %201 = vmatpush1.bf16.msra.mxu0 0
    %202 = vmatprep.subr.bf16.mxu0 0
    %203 = vmatpush1.bf16.msra.mxu0 0
    %204 = vmatprep.subr.bf16.mxu0 0
    %205 = vmatpush1.bf16.msra.mxu0 0
    %206 = vmatprep.subr.bf16.mxu0 0
    %207 = vmatpush1.bf16.msra.mxu0 0
    %208 = vmatprep.subr.bf16.mxu0 0
    %209 = vmatpush1.bf16.msra.mxu0 0
    %210 = vmatprep.mubr.bf16.mxu0 0
    %211 = vmatmul.mubr.bf16.gmra.mrb[0].mxu0 %v166
    %v212 = vpop.f32.mrb[0].mxu0
    %v213 = vadd.f32 %v152, %v212
    %v214 = vpop.f32.mrb[0].mxu0
    %v215 = vadd.f32 %v152, %v214
    %v216 = vpop.f32.mrb[0].mxu0
    %v217 = vadd.f32 %v157, %v216
    %v218 = vpop.f32.mrb[0].mxu0
    %v219 = vadd.f32 %v157, %v218
    %220 = vdwg.mxu0
    %221 = vmatprep.subr.bf16.mxu0 0
    %222 = vmatpush1.bf16.msra.mxu0 %v132
    %223 = vmatprep.subr.bf16.mxu0 0
    %224 = vmatpush1.bf16.msra.mxu0 %v135
    %225 = vmatprep.subr.bf16.mxu0 0
    %226 = vmatpush1.bf16.msra.mxu0 %v138
    %227 = vmatprep.subr.bf16.mxu0 0
    %228 = vmatpush1.bf16.msra.mxu0 %v141
    %229 = vmatprep.subr.bf16.mxu0 0
    %230 = vmatpush1.bf16.msra.mxu0 %v176
    %231 = vmatprep.subr.bf16.mxu0 0
    %232 = vmatpush1.bf16.msra.mxu0 0
    %233 = vmatprep.subr.bf16.mxu0 0
    %234 = vmatpush1.bf16.msra.mxu0 0
    %235 = vmatprep.subr.bf16.mxu0 0
    %236 = vmatpush1.bf16.msra.mxu0 0
    %237 = vmatprep.subr.bf16.mxu0 0
    %238 = vmatpush1.bf16.msra.mxu0 0
    %239 = vmatprep.subr.bf16.mxu0 0
    %240 = vmatpush1.bf16.msra.mxu0 0
    %241 = vmatprep.subr.bf16.mxu0 0
    %242 = vmatpush1.bf16.msra.mxu0 0
    %243 = vmatprep.subr.bf16.mxu0 0
    %244 = vmatpush1.bf16.msra.mxu0 0
    %245 = vmatprep.subr.bf16.mxu0 0
    %246 = vmatpush1.bf16.msra.mxu0 0
    %247 = vmatprep.subr.bf16.mxu0 0
    %248 = vmatpush1.bf16.msra.mxu0 0
    %249 = vmatprep.subr.bf16.mxu0 0
    %250 = vmatpush1.bf16.msra.mxu0 0
    %251 = vmatprep.subr.bf16.mxu0 0
    %252 = vmatpush1.bf16.msra.mxu0 0
    %253 = vmatprep.mubr.bf16.mxu0 0
    %254 = vmatmul.mubr.bf16.gmra.mrb[0].mxu0 %v166
    %v255 = vpop.f32.mrb[0].mxu0
    %v256 = vadd.f32 %v152, %v255
    %v257 = vpop.f32.mrb[0].mxu0
    %v258 = vpop.f32.mrb[0].mxu0
    %v259 = vadd.f32 %v157, %v258
    %v260 = vpop.f32.mrb[0].mxu0
    %261 = vdwg.mxu0
    %v262 = vmax.f32 %v213, 0.0
    %v263 = vmax.f32 %v215, 0.0
    %v264 = vmax.f32 %v256, 0.0
    %v265 = vmax.f32 %v217, 0.0
    %v266 = vmax.f32 %v219, 0.0
    %v267 = vmax.f32 %v259, 0.0
    %274 = vrot.lane.b32.xlu0 %v262, 127
    %v275 = vpop.permute.xlu0 %274
    %276 = vrot.lane.b32.xlu0 %v263, 127
    %v277 = vpop.permute.xlu0 %276
    %278 = vrot.lane.b32.xlu0 %v264, 127
    %v279 = vpop.permute.xlu0 %278
    %280 = vrot.lane.b32.xlu0 %v265, 127
    %v281 = vpop.permute.xlu0 %280
    %282 = vrot.lane.b32.xlu0 %v266, 127
    %v283 = vpop.permute.xlu0 %282
    %284 = vrot.lane.b32.xlu0 %v267, 127
    %v285 = vpop.permute.xlu0 %284
    %v286 = vsel %vm40, %v275, %v277
    %v287 = vsel %vm40, %v277, %v279
    %v288 = vsel %vm40, %v281, %v283
    %v289 = vsel %vm40, %v283, %v285
    %v296 = vmax.f32 %v262, %v286
    %v297 = vmax.f32 %v263, %v287
    %v298 = vmax.f32 %v264, %v279
    %v299 = vmax.f32 %v265, %v288
    %v300 = vmax.f32 %v266, %v289
    %v301 = vmax.f32 %v267, %v285
    %308 = vrot.lane.b32.xlu0 %v296, 110
    %v309 = vpop.permute.xlu0 %308
    %310 = vrot.lane.b32.xlu0 %v297, 110
    %v311 = vpop.permute.xlu0 %310
    %312 = vrot.lane.b32.xlu0 %v298, 110
    %v313 = vpop.permute.xlu0 %312
    %314 = vrot.lane.b32.xlu0 %v299, 110
    %v315 = vpop.permute.xlu0 %314
    %316 = vrot.lane.b32.xlu0 %v300, 110
    %v317 = vpop.permute.xlu0 %316
    %318 = vrot.lane.b32.xlu0 %v301, 110
    %v319 = vpop.permute.xlu0 %318
    %v320 = vsel %vm64, %v309, %v311
    %v321 = vsel %vm64, %v311, %v313
    %v322 = vsel %vm64, %v315, %v317
    %v323 = vsel %vm64, %v317, %v319
    %v330 = vmax.f32 %v296, %v320
    %v331 = vmax.f32 %v297, %v321
    %v332 = vmax.f32 %v298, %v313
    %v333 = vmax.f32 %v299, %v322
    %v334 = vmax.f32 %v300, %v323
    %v335 = vmax.f32 %v301, %v319
    %v336 = vpack.c.bf16 %v333, %v330
    %v337 = vpack.c.bf16 %v334, %v331
    %v338 = vpack.c.bf16 %v335, %v332
    %v339 = vld [vmem:[%s3] sm:$0xf]
    %v340 = vld [vmem:[%s3 + $0x4] sm:$0xf]
    %v341 = vld [vmem:[%s3 + $0x8] sm:$0xf]
    %v342 = vld [vmem:[%s3 + $0xc] sm:$0xf]
    %v343 = vld [vmem:[%s3 + $0x10] sm:$0xf]
    %v344 = vld [vmem:[%s3 + $0x14] sm:$0xf]
    %v345 = vld [vmem:[%s3 + $0x18] sm:$0xf]
    %v346 = vld [vmem:[%s3 + $0x1c] sm:$0xf]
    %v347 = vld [vmem:[%s3 + $0x20] sm:$0xf]
    %v348 = vld [vmem:[%s3 + $0x24] sm:$0xf]
    %v349 = vld [vmem:[%s3 + $0x28] sm:$0xf]
    %v350 = vld [vmem:[%s3 + $0x2c] sm:$0xf]
    %v351 = vld [vmem:[%s3 + $0x30] sm:$0xf]
    %v352 = vld [vmem:[%s3 + $0x34] sm:$0xf]
    %v353 = vld [vmem:[%s3 + $0x38] sm:$0xf]
    %v354 = vld [vmem:[%s3 + $0x3c] sm:$0xf]
    %v355 = vld [vmem:[%s3 + $0x40] sm:$0xf]
    %v356 = vld [vmem:[%s3 + $0x44] sm:$0xf]
    %v357 = vld [vmem:[%s3 + $0x48] sm:$0xf]
    %v358 = vld [vmem:[%s3 + $0x4c] sm:$0xf]
    %v359 = vld [vmem:[%s3 + $0x50] sm:$0xf]
    %v360 = vld [vmem:[%s3 + $0x54] sm:$0xf]
    %v361 = vld [vmem:[%s3 + $0x58] sm:$0xf]
    %v362 = vld [vmem:[%s3 + $0x5c] sm:$0xf]
    %v363 = vld [vmem:[%s3 + $0x60] sm:$0xf]
    %v364 = vld [vmem:[%s3 + $0x64] sm:$0xf]
    %v365 = vld [vmem:[%s3 + $0x68] sm:$0xf]
    %v366 = vld [vmem:[%s3 + $0x6c] sm:$0xf]
    %v367 = vld [vmem:[%s3 + $0x70] sm:$0xf]
    %v368 = vld [vmem:[%s3 + $0x74] sm:$0xf]
    %v369 = vld [vmem:[%s3 + $0x78] sm:$0xf]
    %v370 = vld [vmem:[%s3 + $0x7c] sm:$0xf]
    %v371 = vld [vmem:[%s3 + $0x80] sm:$0xf]
    %v372 = vld [vmem:[%s3 + $0x84] sm:$0xf]
    %v373 = vld [vmem:[%s3 + $0x88] sm:$0xf]
    %v374 = vld [vmem:[%s3 + $0x8c] sm:$0xf]
    %s375 = scalar_lea.vmem %s3, 144
    %v376 = vld [vmem:[%s375] sm:$0xf]
    %v377 = vld [vmem:[%s375 + $0x4] sm:$0xf]
    %v378 = vld [vmem:[%s375 + $0x8] sm:$0xf]
    %v379 = vld [vmem:[%s375 + $0xc] sm:$0xf]
    %v380 = vld [vmem:[%s375 + $0x10] sm:$0xf]
    %v381 = vld [vmem:[%s375 + $0x14] sm:$0xf]
    %v382 = vld [vmem:[%s375 + $0x18] sm:$0xf]
    %v383 = vld [vmem:[%s375 + $0x1c] sm:$0xf]
    %v384 = vld [vmem:[%s375 + $0x20] sm:$0xf]
    %v385 = vld [vmem:[%s375 + $0x24] sm:$0xf]
    %v386 = vld [vmem:[%s375 + $0x28] sm:$0xf]
    %v387 = vld [vmem:[%s375 + $0x2c] sm:$0xf]
    %v388 = vld [vmem:[%s375 + $0x30] sm:$0xf]
    %v389 = vld [vmem:[%s375 + $0x34] sm:$0xf]
    %v390 = vld [vmem:[%s375 + $0x38] sm:$0xf]
    %v391 = vld [vmem:[%s375 + $0x3c] sm:$0xf]
    %v392 = vld [vmem:[%s375 + $0x40] sm:$0xf]
    %v393 = vld [vmem:[%s375 + $0x44] sm:$0xf]
    %v394 = vld [vmem:[%s375 + $0x48] sm:$0xf]
    %v395 = vld [vmem:[%s375 + $0x4c] sm:$0xf]
    %v396 = vld [vmem:[%s375 + $0x50] sm:$0xf]
    %v397 = vld [vmem:[%s375 + $0x54] sm:$0xf]
    %v398 = vld [vmem:[%s375 + $0x58] sm:$0xf]
    %v399 = vld [vmem:[%s375 + $0x5c] sm:$0xf]
    %v400 = vld [vmem:[%s375 + $0x60] sm:$0xf]
    %v401 = vld [vmem:[%s375 + $0x64] sm:$0xf]
    %v402 = vld [vmem:[%s375 + $0x68] sm:$0xf]
    %v403 = vld [vmem:[%s375 + $0x6c] sm:$0xf]
    %v404 = vld [vmem:[%s375 + $0x70] sm:$0xf]
    %v405 = vld [vmem:[%s375 + $0x74] sm:$0xf]
    %v406 = vld [vmem:[%s375 + $0x78] sm:$0xf]
    %v407 = vld [vmem:[%s375 + $0x7c] sm:$0xf]
    %v408 = vld [vmem:[%s375 + $0x80] sm:$0xf]
    %v409 = vld [vmem:[%s375 + $0x84] sm:$0xf]
    %v410 = vld [vmem:[%s375 + $0x88] sm:$0xf]
    %v411 = vld [vmem:[%s375 + $0x8c] sm:$0xf]
    %v415 = vrot.slane %v336, 1
    %v416 = vrot.slane %v337, 1
    %v417 = vrot.slane %v338, 1
    %v456 = vunpack.c.l.b16 %v376
    %v457 = vunpack.c.l.b16 %v377
    %v458 = vunpack.c.l.b16 %v378
    %v459 = vunpack.c.l.b16 %v379
    %v460 = vunpack.c.l.b16 %v380
    %v461 = vunpack.c.l.b16 %v381
    %v462 = vunpack.c.l.b16 %v382
    %v463 = vunpack.c.l.b16 %v383
    %v464 = vunpack.c.l.b16 %v384
    %v465 = vunpack.c.l.b16 %v385
    %v466 = vunpack.c.l.b16 %v386
    %v467 = vunpack.c.l.b16 %v387
    %v468 = vunpack.c.l.b16 %v388
    %v469 = vunpack.c.l.b16 %v389
    %v470 = vunpack.c.l.b16 %v390
    %v471 = vunpack.c.l.b16 %v391
    %v472 = vunpack.c.l.b16 %v392
    %v473 = vunpack.c.l.b16 %v393
    %v474 = vunpack.c.l.b16 %v394
    %v475 = vunpack.c.l.b16 %v395
    %v476 = vunpack.c.l.b16 %v396
    %v477 = vunpack.c.l.b16 %v397
    %v478 = vunpack.c.l.b16 %v398
    %v479 = vunpack.c.l.b16 %v399
    %v480 = vunpack.c.l.b16 %v400
    %v481 = vunpack.c.l.b16 %v401
    %v482 = vunpack.c.l.b16 %v402
    %v483 = vunpack.c.l.b16 %v403
    %v484 = vunpack.c.l.b16 %v404
    %v485 = vunpack.c.l.b16 %v405
    %v486 = vunpack.c.l.b16 %v406
    %v487 = vunpack.c.l.b16 %v407
    %v488 = vunpack.c.l.b16 %v408
    %v489 = vunpack.c.l.b16 %v409
    %v490 = vunpack.c.l.b16 %v410
    %v491 = vunpack.c.l.b16 %v411
    %v492 = vpack.c.b16 %v457, %v456
    %v493 = vpack.c.b16 %v459, %v458
    %v494 = vpack.c.b16 %v461, %v460
    %v495 = vpack.c.b16 %v463, %v462
    %v496 = vpack.c.b16 %v465, %v464
    %v497 = vpack.c.b16 %v467, %v466
    %v498 = vpack.c.b16 %v469, %v468
    %v499 = vpack.c.b16 %v471, %v470
    %v500 = vpack.c.b16 %v473, %v472
    %v501 = vpack.c.b16 %v475, %v474
    %v502 = vpack.c.b16 %v477, %v476
    %v503 = vpack.c.b16 %v479, %v478
    %v504 = vpack.c.b16 %v481, %v480
    %v505 = vpack.c.b16 %v483, %v482
    %v506 = vpack.c.b16 %v485, %v484
    %v507 = vpack.c.b16 %v487, %v486
    %v508 = vpack.c.b16 %v489, %v488
    %v509 = vpack.c.b16 %v491, %v490
    %vm528 = vcmask 261120
    %v530 = vsel %vm528, %v417, 0
    %532 = vmatprep.subr.bf16.mxu0 0
    %533 = vmatpush1.bf16.msra.mxu0 %v492
    %534 = vmatprep.subr.bf16.mxu0 0
    %535 = vmatpush1.bf16.msra.mxu0 %v493
    %536 = vmatprep.subr.bf16.mxu0 0
    %537 = vmatpush1.bf16.msra.mxu0 %v494
    %538 = vmatprep.subr.bf16.mxu0 0
    %539 = vmatpush1.bf16.msra.mxu0 %v495
    %540 = vmatprep.subr.bf16.mxu0 0
    %541 = vmatpush1.bf16.msra.mxu0 %v496
    %542 = vmatprep.subr.bf16.mxu0 0
    %543 = vmatpush1.bf16.msra.mxu0 %v497
    %544 = vmatprep.subr.bf16.mxu0 0
    %545 = vmatpush1.bf16.msra.mxu0 %v498
    %546 = vmatprep.subr.bf16.mxu0 0
    %547 = vmatpush1.bf16.msra.mxu0 %v499
    %548 = vmatprep.subr.bf16.mxu0 0
    %549 = vmatpush1.bf16.msra.mxu0 %v500
    %550 = vmatprep.subr.bf16.mxu0 0
    %551 = vmatpush1.bf16.msra.mxu0 %v501
    %552 = vmatprep.subr.bf16.mxu0 0
    %553 = vmatpush1.bf16.msra.mxu0 %v502
    %554 = vmatprep.subr.bf16.mxu0 0
    %555 = vmatpush1.bf16.msra.mxu0 %v503
    %556 = vmatprep.subr.bf16.mxu0 0
    %557 = vmatpush1.bf16.msra.mxu0 %v504
    %558 = vmatprep.subr.bf16.mxu0 0
    %559 = vmatpush1.bf16.msra.mxu0 %v505
    %560 = vmatprep.subr.bf16.mxu0 0
    %561 = vmatpush1.bf16.msra.mxu0 %v506
    %562 = vmatprep.subr.bf16.mxu0 0
    %563 = vmatpush1.bf16.msra.mxu0 %v507
    %564 = vmatprep.mubr.bf16.mxu0 %v416
    %565 = vmatmul.mubr.bf16.gmra.mrb[0].mxu0 %v415
    %v566 = vpop.f32.mrb[0].mxu0
    %v567 = vadd.f32 0.0, %v566
    %v568 = vpop.f32.mrb[0].mxu0
    %v569 = vpop.f32.mrb[0].mxu0
    %v570 = vpop.f32.mrb[0].mxu0
    %571 = vdwg.mxu0
    %572 = vmatprep.subr.bf16.mxu0 0
    %573 = vmatpush1.bf16.msra.mxu0 %v508
    %574 = vmatprep.subr.bf16.mxu0 0
    %575 = vmatpush1.bf16.msra.mxu0 %v509
    %576 = vmatprep.subr.bf16.mxu0 0
    %577 = vmatpush1.bf16.msra.mxu0 0
    %578 = vmatprep.subr.bf16.mxu0 0
    %579 = vmatpush1.bf16.msra.mxu0 0
    %580 = vmatprep.subr.bf16.mxu0 0
    %581 = vmatpush1.bf16.msra.mxu0 0
    %582 = vmatprep.subr.bf16.mxu0 0
    %583 = vmatpush1.bf16.msra.mxu0 0
    %584 = vmatprep.subr.bf16.mxu0 0
    %585 = vmatpush1.bf16.msra.mxu0 0
    %586 = vmatprep.subr.bf16.mxu0 0
    %587 = vmatpush1.bf16.msra.mxu0 0
    %588 = vmatprep.subr.bf16.mxu0 0
    %589 = vmatpush1.bf16.msra.mxu0 0
    %590 = vmatprep.subr.bf16.mxu0 0
    %591 = vmatpush1.bf16.msra.mxu0 0
    %592 = vmatprep.subr.bf16.mxu0 0
    %593 = vmatpush1.bf16.msra.mxu0 0
    %594 = vmatprep.subr.bf16.mxu0 0
    %595 = vmatpush1.bf16.msra.mxu0 0
    %596 = vmatprep.subr.bf16.mxu0 0
    %597 = vmatpush1.bf16.msra.mxu0 0
    %598 = vmatprep.subr.bf16.mxu0 0
    %599 = vmatpush1.bf16.msra.mxu0 0
    %600 = vmatprep.subr.bf16.mxu0 0
    %601 = vmatpush1.bf16.msra.mxu0 0
    %602 = vmatprep.subr.bf16.mxu0 0
    %603 = vmatpush1.bf16.msra.mxu0 0
    %604 = vmatprep.mubr.bf16.mxu0 0
    %605 = vmatmul.mubr.bf16.gmra.mrb[0].mxu0 %v530
    %v606 = vpop.f32.mrb[0].mxu0
    %v607 = vadd.f32 %v567, %v606
    %v608 = vpop.f32.mrb[0].mxu0
    %v609 = vpop.f32.mrb[0].mxu0
    %v610 = vpop.f32.mrb[0].mxu0
    %611 = vdwg.mxu0
    %v648 = vunpack.c.l.b16 %v339
    %v649 = vunpack.c.l.b16 %v340
    %v650 = vunpack.c.l.b16 %v341
    %v651 = vunpack.c.l.b16 %v342
    %v652 = vunpack.c.l.b16 %v343
    %v653 = vunpack.c.l.b16 %v344
    %v654 = vunpack.c.l.b16 %v345
    %v655 = vunpack.c.l.b16 %v346
    %v656 = vunpack.c.l.b16 %v347
    %v657 = vunpack.c.l.b16 %v348
    %v658 = vunpack.c.l.b16 %v349
    %v659 = vunpack.c.l.b16 %v350
    %v660 = vunpack.c.l.b16 %v351
    %v661 = vunpack.c.l.b16 %v352
    %v662 = vunpack.c.l.b16 %v353
    %v663 = vunpack.c.l.b16 %v354
    %v664 = vunpack.c.l.b16 %v355
    %v665 = vunpack.c.l.b16 %v356
    %v666 = vunpack.c.l.b16 %v357
    %v667 = vunpack.c.l.b16 %v358
    %v668 = vunpack.c.l.b16 %v359
    %v669 = vunpack.c.l.b16 %v360
    %v670 = vunpack.c.l.b16 %v361
    %v671 = vunpack.c.l.b16 %v362
    %v672 = vunpack.c.l.b16 %v363
    %v673 = vunpack.c.l.b16 %v364
    %v674 = vunpack.c.l.b16 %v365
    %v675 = vunpack.c.l.b16 %v366
    %v676 = vunpack.c.l.b16 %v367
    %v677 = vunpack.c.l.b16 %v368
    %v678 = vunpack.c.l.b16 %v369
    %v679 = vunpack.c.l.b16 %v370
    %v680 = vunpack.c.l.b16 %v371
    %v681 = vunpack.c.l.b16 %v372
    %v682 = vunpack.c.l.b16 %v373
    %v683 = vunpack.c.l.b16 %v374
    %v684 = vpack.c.b16 %v649, %v648
    %v685 = vpack.c.b16 %v651, %v650
    %v686 = vpack.c.b16 %v653, %v652
    %v687 = vpack.c.b16 %v655, %v654
    %v688 = vpack.c.b16 %v657, %v656
    %v689 = vpack.c.b16 %v659, %v658
    %v690 = vpack.c.b16 %v661, %v660
    %v691 = vpack.c.b16 %v663, %v662
    %v692 = vpack.c.b16 %v665, %v664
    %v693 = vpack.c.b16 %v667, %v666
    %v694 = vpack.c.b16 %v669, %v668
    %v695 = vpack.c.b16 %v671, %v670
    %v696 = vpack.c.b16 %v673, %v672
    %v697 = vpack.c.b16 %v675, %v674
    %v698 = vpack.c.b16 %v677, %v676
    %v699 = vpack.c.b16 %v679, %v678
    %v700 = vpack.c.b16 %v681, %v680
    %v701 = vpack.c.b16 %v683, %v682
    %v721 = vsel %vm528, %v338, 0
    %723 = vmatprep.subr.bf16.mxu0 0
    %724 = vmatpush1.bf16.msra.mxu0 %v684
    %725 = vmatprep.subr.bf16.mxu0 0
    %726 = vmatpush1.bf16.msra.mxu0 %v685
    %727 = vmatprep.subr.bf16.mxu0 0
    %728 = vmatpush1.bf16.msra.mxu0 %v686
    %729 = vmatprep.subr.bf16.mxu0 0
    %730 = vmatpush1.bf16.msra.mxu0 %v687
    %731 = vmatprep.subr.bf16.mxu0 0
    %732 = vmatpush1.bf16.msra.mxu0 %v688
    %733 = vmatprep.subr.bf16.mxu0 0
    %734 = vmatpush1.bf16.msra.mxu0 %v689
    %735 = vmatprep.subr.bf16.mxu0 0
    %736 = vmatpush1.bf16.msra.mxu0 %v690
    %737 = vmatprep.subr.bf16.mxu0 0
    %738 = vmatpush1.bf16.msra.mxu0 %v691
    %739 = vmatprep.subr.bf16.mxu0 0
    %740 = vmatpush1.bf16.msra.mxu0 %v692
    %741 = vmatprep.subr.bf16.mxu0 0
    %742 = vmatpush1.bf16.msra.mxu0 %v693
    %743 = vmatprep.subr.bf16.mxu0 0
    %744 = vmatpush1.bf16.msra.mxu0 %v694
    %745 = vmatprep.subr.bf16.mxu0 0
    %746 = vmatpush1.bf16.msra.mxu0 %v695
    %747 = vmatprep.subr.bf16.mxu0 0
    %748 = vmatpush1.bf16.msra.mxu0 %v696
    %749 = vmatprep.subr.bf16.mxu0 0
    %750 = vmatpush1.bf16.msra.mxu0 %v697
    %751 = vmatprep.subr.bf16.mxu0 0
    %752 = vmatpush1.bf16.msra.mxu0 %v698
    %753 = vmatprep.subr.bf16.mxu0 0
    %754 = vmatpush1.bf16.msra.mxu0 %v699
    %755 = vmatprep.mubr.bf16.mxu0 %v337
    %756 = vmatmul.mubr.bf16.gmra.mrb[0].mxu0 %v336
    %v757 = vpop.f32.mrb[0].mxu0
    %v758 = vadd.f32 %v607, %v757
    %v759 = vpop.f32.mrb[0].mxu0
    %v760 = vpop.f32.mrb[0].mxu0
    %v761 = vpop.f32.mrb[0].mxu0
    %762 = vdwg.mxu0
    %763 = vmatprep.subr.bf16.mxu0 0
    %764 = vmatpush1.bf16.msra.mxu0 %v700
    %765 = vmatprep.subr.bf16.mxu0 0
    %766 = vmatpush1.bf16.msra.mxu0 %v701
    %767 = vmatprep.subr.bf16.mxu0 0
    %768 = vmatpush1.bf16.msra.mxu0 0
    %769 = vmatprep.subr.bf16.mxu0 0
    %770 = vmatpush1.bf16.msra.mxu0 0
    %771 = vmatprep.subr.bf16.mxu0 0
    %772 = vmatpush1.bf16.msra.mxu0 0
    %773 = vmatprep.subr.bf16.mxu0 0
    %774 = vmatpush1.bf16.msra.mxu0 0
    %775 = vmatprep.subr.bf16.mxu0 0
    %776 = vmatpush1.bf16.msra.mxu0 0
    %777 = vmatprep.subr.bf16.mxu0 0
    %778 = vmatpush1.bf16.msra.mxu0 0
    %779 = vmatprep.subr.bf16.mxu0 0
    %780 = vmatpush1.bf16.msra.mxu0 0
    %781 = vmatprep.subr.bf16.mxu0 0
    %782 = vmatpush1.bf16.msra.mxu0 0
    %783 = vmatprep.subr.bf16.mxu0 0
    %784 = vmatpush1.bf16.msra.mxu0 0
    %785 = vmatprep.subr.bf16.mxu0 0
    %786 = vmatpush1.bf16.msra.mxu0 0
    %787 = vmatprep.subr.bf16.mxu0 0
    %788 = vmatpush1.bf16.msra.mxu0 0
    %789 = vmatprep.subr.bf16.mxu0 0
    %790 = vmatpush1.bf16.msra.mxu0 0
    %791 = vmatprep.subr.bf16.mxu0 0
    %792 = vmatpush1.bf16.msra.mxu0 0
    %793 = vmatprep.subr.bf16.mxu0 0
    %794 = vmatpush1.bf16.msra.mxu0 0
    %795 = vmatprep.mubr.bf16.mxu0 0
    %796 = vmatmul.mubr.bf16.gmra.mrb[0].mxu0 %v721
    %v797 = vpop.f32.mrb[0].mxu0
    %v798 = vadd.f32 %v758, %v797
    %v799 = vpop.f32.mrb[0].mxu0
    %v800 = vpop.f32.mrb[0].mxu0
    %v801 = vpop.f32.mrb[0].mxu0
    %802 = vdwg.mxu0
    %s803 = scalar_lea.vmem %s3, 288
    %v804 = vld [vmem:[%s803] sm:$0xf]
    %v805 = vld [vmem:[%s803 + $0x4] sm:$0xf]
    %v806 = vld [vmem:[%s803 + $0x8] sm:$0xf]
    %v807 = vld [vmem:[%s803 + $0xc] sm:$0xf]
    %v808 = vld [vmem:[%s803 + $0x10] sm:$0xf]
    %v809 = vld [vmem:[%s803 + $0x14] sm:$0xf]
    %v810 = vld [vmem:[%s803 + $0x18] sm:$0xf]
    %v811 = vld [vmem:[%s803 + $0x1c] sm:$0xf]
    %v812 = vld [vmem:[%s803 + $0x20] sm:$0xf]
    %v813 = vld [vmem:[%s803 + $0x24] sm:$0xf]
    %v814 = vld [vmem:[%s803 + $0x28] sm:$0xf]
    %v815 = vld [vmem:[%s803 + $0x2c] sm:$0xf]
    %v816 = vld [vmem:[%s803 + $0x30] sm:$0xf]
    %v817 = vld [vmem:[%s803 + $0x34] sm:$0xf]
    %v818 = vld [vmem:[%s803 + $0x38] sm:$0xf]
    %v819 = vld [vmem:[%s803 + $0x3c] sm:$0xf]
    %v820 = vld [vmem:[%s803 + $0x40] sm:$0xf]
    %v821 = vld [vmem:[%s803 + $0x44] sm:$0xf]
    %v822 = vld [vmem:[%s803 + $0x48] sm:$0xf]
    %v823 = vld [vmem:[%s803 + $0x4c] sm:$0xf]
    %v824 = vld [vmem:[%s803 + $0x50] sm:$0xf]
    %v825 = vld [vmem:[%s803 + $0x54] sm:$0xf]
    %v826 = vld [vmem:[%s803 + $0x58] sm:$0xf]
    %v827 = vld [vmem:[%s803 + $0x5c] sm:$0xf]
    %v828 = vld [vmem:[%s803 + $0x60] sm:$0xf]
    %v829 = vld [vmem:[%s803 + $0x64] sm:$0xf]
    %v830 = vld [vmem:[%s803 + $0x68] sm:$0xf]
    %v831 = vld [vmem:[%s803 + $0x6c] sm:$0xf]
    %v832 = vld [vmem:[%s803 + $0x70] sm:$0xf]
    %v833 = vld [vmem:[%s803 + $0x74] sm:$0xf]
    %v834 = vld [vmem:[%s803 + $0x78] sm:$0xf]
    %v835 = vld [vmem:[%s803 + $0x7c] sm:$0xf]
    %v836 = vld [vmem:[%s803 + $0x80] sm:$0xf]
    %v837 = vld [vmem:[%s803 + $0x84] sm:$0xf]
    %v838 = vld [vmem:[%s803 + $0x88] sm:$0xf]
    %v839 = vld [vmem:[%s803 + $0x8c] sm:$0xf]
    %v840 = vrot.slane %v336, 2
    %v841 = vrot.slane %v337, 2
    %v842 = vrot.slane %v338, 2
    %v881 = vunpack.c.l.b16 %v804
    %v882 = vunpack.c.l.b16 %v805
    %v883 = vunpack.c.l.b16 %v806
    %v884 = vunpack.c.l.b16 %v807
    %v885 = vunpack.c.l.b16 %v808
    %v886 = vunpack.c.l.b16 %v809
    %v887 = vunpack.c.l.b16 %v810
    %v888 = vunpack.c.l.b16 %v811
    %v889 = vunpack.c.l.b16 %v812
    %v890 = vunpack.c.l.b16 %v813
    %v891 = vunpack.c.l.b16 %v814
    %v892 = vunpack.c.l.b16 %v815
    %v893 = vunpack.c.l.b16 %v816
    %v894 = vunpack.c.l.b16 %v817
    %v895 = vunpack.c.l.b16 %v818
    %v896 = vunpack.c.l.b16 %v819
    %v897 = vunpack.c.l.b16 %v820
    %v898 = vunpack.c.l.b16 %v821
    %v899 = vunpack.c.l.b16 %v822
    %v900 = vunpack.c.l.b16 %v823
    %v901 = vunpack.c.l.b16 %v824
    %v902 = vunpack.c.l.b16 %v825
    %v903 = vunpack.c.l.b16 %v826
    %v904 = vunpack.c.l.b16 %v827
    %v905 = vunpack.c.l.b16 %v828
    %v906 = vunpack.c.l.b16 %v829
    %v907 = vunpack.c.l.b16 %v830
    %v908 = vunpack.c.l.b16 %v831
    %v909 = vunpack.c.l.b16 %v832
    %v910 = vunpack.c.l.b16 %v833
    %v911 = vunpack.c.l.b16 %v834
    %v912 = vunpack.c.l.b16 %v835
    %v913 = vunpack.c.l.b16 %v836
    %v914 = vunpack.c.l.b16 %v837
    %v915 = vunpack.c.l.b16 %v838
    %v916 = vunpack.c.l.b16 %v839
    %v917 = vpack.c.b16 %v882, %v881
    %v918 = vpack.c.b16 %v884, %v883
    %v919 = vpack.c.b16 %v886, %v885
    %v920 = vpack.c.b16 %v888, %v887
    %v921 = vpack.c.b16 %v890, %v889
    %v922 = vpack.c.b16 %v892, %v891
    %v923 = vpack.c.b16 %v894, %v893
    %v924 = vpack.c.b16 %v896, %v895
    %v925 = vpack.c.b16 %v898, %v897
    %v926 = vpack.c.b16 %v900, %v899
    %v927 = vpack.c.b16 %v902, %v901
    %v928 = vpack.c.b16 %v904, %v903
    %v929 = vpack.c.b16 %v906, %v905
    %v930 = vpack.c.b16 %v908, %v907
    %v931 = vpack.c.b16 %v910, %v909
    %v932 = vpack.c.b16 %v912, %v911
    %v933 = vpack.c.b16 %v914, %v913
    %v934 = vpack.c.b16 %v916, %v915
    %v954 = vsel %vm528, %v842, 0
    %956 = vmatprep.subr.bf16.mxu0 0
    %957 = vmatpush1.bf16.msra.mxu0 %v917
    %958 = vmatprep.subr.bf16.mxu0 0
    %959 = vmatpush1.bf16.msra.mxu0 %v918
    %960 = vmatprep.subr.bf16.mxu0 0
    %961 = vmatpush1.bf16.msra.mxu0 %v919
    %962 = vmatprep.subr.bf16.mxu0 0
    %963 = vmatpush1.bf16.msra.mxu0 %v920
    %964 = vmatprep.subr.bf16.mxu0 0
    %965 = vmatpush1.bf16.msra.mxu0 %v921
    %966 = vmatprep.subr.bf16.mxu0 0
    %967 = vmatpush1.bf16.msra.mxu0 %v922
    %968 = vmatprep.subr.bf16.mxu0 0
    %969 = vmatpush1.bf16.msra.mxu0 %v923
    %970 = vmatprep.subr.bf16.mxu0 0
    %971 = vmatpush1.bf16.msra.mxu0 %v924
    %972 = vmatprep.subr.bf16.mxu0 0
    %973 = vmatpush1.bf16.msra.mxu0 %v925
    %974 = vmatprep.subr.bf16.mxu0 0
    %975 = vmatpush1.bf16.msra.mxu0 %v926
    %976 = vmatprep.subr.bf16.mxu0 0
    %977 = vmatpush1.bf16.msra.mxu0 %v927
    %978 = vmatprep.subr.bf16.mxu0 0
    %979 = vmatpush1.bf16.msra.mxu0 %v928
    %980 = vmatprep.subr.bf16.mxu0 0
    %981 = vmatpush1.bf16.msra.mxu0 %v929
    %982 = vmatprep.subr.bf16.mxu0 0
    %983 = vmatpush1.bf16.msra.mxu0 %v930
    %984 = vmatprep.subr.bf16.mxu0 0
    %985 = vmatpush1.bf16.msra.mxu0 %v931
    %986 = vmatprep.subr.bf16.mxu0 0
    %987 = vmatpush1.bf16.msra.mxu0 %v932
    %988 = vmatprep.mubr.bf16.mxu0 %v841
    %989 = vmatmul.mubr.bf16.gmra.mrb[0].mxu0 %v840
    %v990 = vpop.f32.mrb[0].mxu0
    %v991 = vadd.f32 0.0, %v990
    %v992 = vpop.f32.mrb[0].mxu0
    %v993 = vpop.f32.mrb[0].mxu0
    %v994 = vpop.f32.mrb[0].mxu0
    %995 = vdwg.mxu0
    %996 = vmatprep.subr.bf16.mxu0 0
    %997 = vmatpush1.bf16.msra.mxu0 %v933
    %998 = vmatprep.subr.bf16.mxu0 0
    %999 = vmatpush1.bf16.msra.mxu0 %v934
    %1000 = vmatprep.subr.bf16.mxu0 0
    %1001 = vmatpush1.bf16.msra.mxu0 0
    %1002 = vmatprep.subr.bf16.mxu0 0
    %1003 = vmatpush1.bf16.msra.mxu0 0
    %1004 = vmatprep.subr.bf16.mxu0 0
    %1005 = vmatpush1.bf16.msra.mxu0 0
    %1006 = vmatprep.subr.bf16.mxu0 0
    %1007 = vmatpush1.bf16.msra.mxu0 0
    %1008 = vmatprep.subr.bf16.mxu0 0
    %1009 = vmatpush1.bf16.msra.mxu0 0
    %1010 = vmatprep.subr.bf16.mxu0 0
    %1011 = vmatpush1.bf16.msra.mxu0 0
    %1012 = vmatprep.subr.bf16.mxu0 0
    %1013 = vmatpush1.bf16.msra.mxu0 0
    %1014 = vmatprep.subr.bf16.mxu0 0
    %1015 = vmatpush1.bf16.msra.mxu0 0
    %1016 = vmatprep.subr.bf16.mxu0 0
    %1017 = vmatpush1.bf16.msra.mxu0 0
    %1018 = vmatprep.subr.bf16.mxu0 0
    %1019 = vmatpush1.bf16.msra.mxu0 0
    %1020 = vmatprep.subr.bf16.mxu0 0
    %1021 = vmatpush1.bf16.msra.mxu0 0
    %1022 = vmatprep.subr.bf16.mxu0 0
    %1023 = vmatpush1.bf16.msra.mxu0 0
    %1024 = vmatprep.subr.bf16.mxu0 0
    %1025 = vmatpush1.bf16.msra.mxu0 0
    %1026 = vmatprep.subr.bf16.mxu0 0
    %1027 = vmatpush1.bf16.msra.mxu0 0
    %1028 = vmatprep.mubr.bf16.mxu0 0
    %1029 = vmatmul.mubr.bf16.gmra.mrb[0].mxu0 %v954
    %v1030 = vpop.f32.mrb[0].mxu0
    %v1031 = vadd.f32 %v991, %v1030
    %v1032 = vpop.f32.mrb[0].mxu0
    %v1033 = vpop.f32.mrb[0].mxu0
    %v1034 = vpop.f32.mrb[0].mxu0
    %1035 = vdwg.mxu0
    %v1036 = vadd.f32 %v798, %v1031
    %s1037 = scalar_lea.vmem %s3, 432
    %v1038 = vld [vmem:[%s1037] sm:$0xf]
    %v1039 = vld [vmem:[%s1037 + $0x4] sm:$0xf]
    %v1040 = vld [vmem:[%s1037 + $0x8] sm:$0xf]
    %v1041 = vld [vmem:[%s1037 + $0xc] sm:$0xf]
    %v1042 = vld [vmem:[%s1037 + $0x10] sm:$0xf]
    %v1043 = vld [vmem:[%s1037 + $0x14] sm:$0xf]
    %v1044 = vld [vmem:[%s1037 + $0x18] sm:$0xf]
    %v1045 = vld [vmem:[%s1037 + $0x1c] sm:$0xf]
    %v1046 = vld [vmem:[%s1037 + $0x20] sm:$0xf]
    %v1047 = vld [vmem:[%s1037 + $0x24] sm:$0xf]
    %v1048 = vld [vmem:[%s1037 + $0x28] sm:$0xf]
    %v1049 = vld [vmem:[%s1037 + $0x2c] sm:$0xf]
    %v1050 = vld [vmem:[%s1037 + $0x30] sm:$0xf]
    %v1051 = vld [vmem:[%s1037 + $0x34] sm:$0xf]
    %v1052 = vld [vmem:[%s1037 + $0x38] sm:$0xf]
    %v1053 = vld [vmem:[%s1037 + $0x3c] sm:$0xf]
    %v1054 = vld [vmem:[%s1037 + $0x40] sm:$0xf]
    %v1055 = vld [vmem:[%s1037 + $0x44] sm:$0xf]
    %v1056 = vld [vmem:[%s1037 + $0x48] sm:$0xf]
    %v1057 = vld [vmem:[%s1037 + $0x4c] sm:$0xf]
    %v1058 = vld [vmem:[%s1037 + $0x50] sm:$0xf]
    %v1059 = vld [vmem:[%s1037 + $0x54] sm:$0xf]
    %v1060 = vld [vmem:[%s1037 + $0x58] sm:$0xf]
    %v1061 = vld [vmem:[%s1037 + $0x5c] sm:$0xf]
    %v1062 = vld [vmem:[%s1037 + $0x60] sm:$0xf]
    %v1063 = vld [vmem:[%s1037 + $0x64] sm:$0xf]
    %v1064 = vld [vmem:[%s1037 + $0x68] sm:$0xf]
    %v1065 = vld [vmem:[%s1037 + $0x6c] sm:$0xf]
    %v1066 = vld [vmem:[%s1037 + $0x70] sm:$0xf]
    %v1067 = vld [vmem:[%s1037 + $0x74] sm:$0xf]
    %v1068 = vld [vmem:[%s1037 + $0x78] sm:$0xf]
    %v1069 = vld [vmem:[%s1037 + $0x7c] sm:$0xf]
    %v1070 = vld [vmem:[%s1037 + $0x80] sm:$0xf]
    %v1071 = vld [vmem:[%s1037 + $0x84] sm:$0xf]
    %v1072 = vld [vmem:[%s1037 + $0x88] sm:$0xf]
    %v1073 = vld [vmem:[%s1037 + $0x8c] sm:$0xf]
    %v1074 = vrot.slane %v336, 3
    %v1075 = vrot.slane %v337, 3
    %v1076 = vrot.slane %v338, 3
    %v1115 = vunpack.c.l.b16 %v1038
    %v1116 = vunpack.c.l.b16 %v1039
    %v1117 = vunpack.c.l.b16 %v1040
    %v1118 = vunpack.c.l.b16 %v1041
    %v1119 = vunpack.c.l.b16 %v1042
    %v1120 = vunpack.c.l.b16 %v1043
    %v1121 = vunpack.c.l.b16 %v1044
    %v1122 = vunpack.c.l.b16 %v1045
    %v1123 = vunpack.c.l.b16 %v1046
    %v1124 = vunpack.c.l.b16 %v1047
    %v1125 = vunpack.c.l.b16 %v1048
    %v1126 = vunpack.c.l.b16 %v1049
    %v1127 = vunpack.c.l.b16 %v1050
    %v1128 = vunpack.c.l.b16 %v1051
    %v1129 = vunpack.c.l.b16 %v1052
    %v1130 = vunpack.c.l.b16 %v1053
    %v1131 = vunpack.c.l.b16 %v1054
    %v1132 = vunpack.c.l.b16 %v1055
    %v1133 = vunpack.c.l.b16 %v1056
    %v1134 = vunpack.c.l.b16 %v1057
    %v1135 = vunpack.c.l.b16 %v1058
    %v1136 = vunpack.c.l.b16 %v1059
    %v1137 = vunpack.c.l.b16 %v1060
    %v1138 = vunpack.c.l.b16 %v1061
    %v1139 = vunpack.c.l.b16 %v1062
    %v1140 = vunpack.c.l.b16 %v1063
    %v1141 = vunpack.c.l.b16 %v1064
    %v1142 = vunpack.c.l.b16 %v1065
    %v1143 = vunpack.c.l.b16 %v1066
    %v1144 = vunpack.c.l.b16 %v1067
    %v1145 = vunpack.c.l.b16 %v1068
    %v1146 = vunpack.c.l.b16 %v1069
    %v1147 = vunpack.c.l.b16 %v1070
    %v1148 = vunpack.c.l.b16 %v1071
    %v1149 = vunpack.c.l.b16 %v1072
    %v1150 = vunpack.c.l.b16 %v1073
    %v1151 = vpack.c.b16 %v1116, %v1115
    %v1152 = vpack.c.b16 %v1118, %v1117
    %v1153 = vpack.c.b16 %v1120, %v1119
    %v1154 = vpack.c.b16 %v1122, %v1121
    %v1155 = vpack.c.b16 %v1124, %v1123
    %v1156 = vpack.c.b16 %v1126, %v1125
    %v1157 = vpack.c.b16 %v1128, %v1127
    %v1158 = vpack.c.b16 %v1130, %v1129
    %v1159 = vpack.c.b16 %v1132, %v1131
    %v1160 = vpack.c.b16 %v1134, %v1133
    %v1161 = vpack.c.b16 %v1136, %v1135
    %v1162 = vpack.c.b16 %v1138, %v1137
    %v1163 = vpack.c.b16 %v1140, %v1139
    %v1164 = vpack.c.b16 %v1142, %v1141
    %v1165 = vpack.c.b16 %v1144, %v1143
    %v1166 = vpack.c.b16 %v1146, %v1145
    %v1167 = vpack.c.b16 %v1148, %v1147
    %v1168 = vpack.c.b16 %v1150, %v1149
    %v1188 = vsel %vm528, %v1076, 0
    %1190 = vmatprep.subr.bf16.mxu0 0
    %1191 = vmatpush1.bf16.msra.mxu0 %v1151
    %1192 = vmatprep.subr.bf16.mxu0 0
    %1193 = vmatpush1.bf16.msra.mxu0 %v1152
    %1194 = vmatprep.subr.bf16.mxu0 0
    %1195 = vmatpush1.bf16.msra.mxu0 %v1153
    %1196 = vmatprep.subr.bf16.mxu0 0
    %1197 = vmatpush1.bf16.msra.mxu0 %v1154
    %1198 = vmatprep.subr.bf16.mxu0 0
    %1199 = vmatpush1.bf16.msra.mxu0 %v1155
    %1200 = vmatprep.subr.bf16.mxu0 0
    %1201 = vmatpush1.bf16.msra.mxu0 %v1156
    %1202 = vmatprep.subr.bf16.mxu0 0
    %1203 = vmatpush1.bf16.msra.mxu0 %v1157
    %1204 = vmatprep.subr.bf16.mxu0 0
    %1205 = vmatpush1.bf16.msra.mxu0 %v1158
    %1206 = vmatprep.subr.bf16.mxu0 0
    %1207 = vmatpush1.bf16.msra.mxu0 %v1159
    %1208 = vmatprep.subr.bf16.mxu0 0
    %1209 = vmatpush1.bf16.msra.mxu0 %v1160
    %1210 = vmatprep.subr.bf16.mxu0 0
    %1211 = vmatpush1.bf16.msra.mxu0 %v1161
    %1212 = vmatprep.subr.bf16.mxu0 0
    %1213 = vmatpush1.bf16.msra.mxu0 %v1162
    %1214 = vmatprep.subr.bf16.mxu0 0
    %1215 = vmatpush1.bf16.msra.mxu0 %v1163
    %1216 = vmatprep.subr.bf16.mxu0 0
    %1217 = vmatpush1.bf16.msra.mxu0 %v1164
    %1218 = vmatprep.subr.bf16.mxu0 0
    %1219 = vmatpush1.bf16.msra.mxu0 %v1165
    %1220 = vmatprep.subr.bf16.mxu0 0
    %1221 = vmatpush1.bf16.msra.mxu0 %v1166
    %1222 = vmatprep.mubr.bf16.mxu0 %v1075
    %1223 = vmatmul.mubr.bf16.gmra.mrb[0].mxu0 %v1074
    %v1224 = vpop.f32.mrb[0].mxu0
    %v1225 = vadd.f32 0.0, %v1224
    %v1226 = vpop.f32.mrb[0].mxu0
    %v1227 = vpop.f32.mrb[0].mxu0
    %v1228 = vpop.f32.mrb[0].mxu0
    %1229 = vdwg.mxu0
    %1230 = vmatprep.subr.bf16.mxu0 0
    %1231 = vmatpush1.bf16.msra.mxu0 %v1167
    %1232 = vmatprep.subr.bf16.mxu0 0
    %1233 = vmatpush1.bf16.msra.mxu0 %v1168
    %1234 = vmatprep.subr.bf16.mxu0 0
    %1235 = vmatpush1.bf16.msra.mxu0 0
    %1236 = vmatprep.subr.bf16.mxu0 0
    %1237 = vmatpush1.bf16.msra.mxu0 0
    %1238 = vmatprep.subr.bf16.mxu0 0
    %1239 = vmatpush1.bf16.msra.mxu0 0
    %1240 = vmatprep.subr.bf16.mxu0 0
    %1241 = vmatpush1.bf16.msra.mxu0 0
    %1242 = vmatprep.subr.bf16.mxu0 0
    %1243 = vmatpush1.bf16.msra.mxu0 0
    %1244 = vmatprep.subr.bf16.mxu0 0
    %1245 = vmatpush1.bf16.msra.mxu0 0
    %1246 = vmatprep.subr.bf16.mxu0 0
    %1247 = vmatpush1.bf16.msra.mxu0 0
    %1248 = vmatprep.subr.bf16.mxu0 0
    %1249 = vmatpush1.bf16.msra.mxu0 0
    %1250 = vmatprep.subr.bf16.mxu0 0
    %1251 = vmatpush1.bf16.msra.mxu0 0
    %1252 = vmatprep.subr.bf16.mxu0 0
    %1253 = vmatpush1.bf16.msra.mxu0 0
    %1254 = vmatprep.subr.bf16.mxu0 0
    %1255 = vmatpush1.bf16.msra.mxu0 0
    %1256 = vmatprep.subr.bf16.mxu0 0
    %1257 = vmatpush1.bf16.msra.mxu0 0
    %1258 = vmatprep.subr.bf16.mxu0 0
    %1259 = vmatpush1.bf16.msra.mxu0 0
    %1260 = vmatprep.subr.bf16.mxu0 0
    %1261 = vmatpush1.bf16.msra.mxu0 0
    %1262 = vmatprep.mubr.bf16.mxu0 0
    %1263 = vmatmul.mubr.bf16.gmra.mrb[0].mxu0 %v1188
    %v1264 = vpop.f32.mrb[0].mxu0
    %v1265 = vadd.f32 %v1225, %v1264
    %v1266 = vpop.f32.mrb[0].mxu0
    %v1267 = vpop.f32.mrb[0].mxu0
    %v1268 = vpop.f32.mrb[0].mxu0
    %1269 = vdwg.mxu0
    %v1270 = vadd.f32 %v1036, %v1265
    %s1271 = scalar_lea.vmem %s3, 576
    %v1272 = vld [vmem:[%s1271] sm:$0xf]
    %v1273 = vld [vmem:[%s1271 + $0x4] sm:$0xf]
    %v1274 = vld [vmem:[%s1271 + $0x8] sm:$0xf]
    %v1275 = vld [vmem:[%s1271 + $0xc] sm:$0xf]
    %v1276 = vld [vmem:[%s1271 + $0x10] sm:$0xf]
    %v1277 = vld [vmem:[%s1271 + $0x14] sm:$0xf]
    %v1278 = vld [vmem:[%s1271 + $0x18] sm:$0xf]
    %v1279 = vld [vmem:[%s1271 + $0x1c] sm:$0xf]
    %v1280 = vld [vmem:[%s1271 + $0x20] sm:$0xf]
    %v1281 = vld [vmem:[%s1271 + $0x24] sm:$0xf]
    %v1282 = vld [vmem:[%s1271 + $0x28] sm:$0xf]
    %v1283 = vld [vmem:[%s1271 + $0x2c] sm:$0xf]
    %v1284 = vld [vmem:[%s1271 + $0x30] sm:$0xf]
    %v1285 = vld [vmem:[%s1271 + $0x34] sm:$0xf]
    %v1286 = vld [vmem:[%s1271 + $0x38] sm:$0xf]
    %v1287 = vld [vmem:[%s1271 + $0x3c] sm:$0xf]
    %v1288 = vld [vmem:[%s1271 + $0x40] sm:$0xf]
    %v1289 = vld [vmem:[%s1271 + $0x44] sm:$0xf]
    %v1290 = vld [vmem:[%s1271 + $0x48] sm:$0xf]
    %v1291 = vld [vmem:[%s1271 + $0x4c] sm:$0xf]
    %v1292 = vld [vmem:[%s1271 + $0x50] sm:$0xf]
    %v1293 = vld [vmem:[%s1271 + $0x54] sm:$0xf]
    %v1294 = vld [vmem:[%s1271 + $0x58] sm:$0xf]
    %v1295 = vld [vmem:[%s1271 + $0x5c] sm:$0xf]
    %v1296 = vld [vmem:[%s1271 + $0x60] sm:$0xf]
    %v1297 = vld [vmem:[%s1271 + $0x64] sm:$0xf]
    %v1298 = vld [vmem:[%s1271 + $0x68] sm:$0xf]
    %v1299 = vld [vmem:[%s1271 + $0x6c] sm:$0xf]
    %v1300 = vld [vmem:[%s1271 + $0x70] sm:$0xf]
    %v1301 = vld [vmem:[%s1271 + $0x74] sm:$0xf]
    %v1302 = vld [vmem:[%s1271 + $0x78] sm:$0xf]
    %v1303 = vld [vmem:[%s1271 + $0x7c] sm:$0xf]
    %v1304 = vld [vmem:[%s1271 + $0x80] sm:$0xf]
    %v1305 = vld [vmem:[%s1271 + $0x84] sm:$0xf]
    %v1306 = vld [vmem:[%s1271 + $0x88] sm:$0xf]
    %v1307 = vld [vmem:[%s1271 + $0x8c] sm:$0xf]
    %v1308 = vrot.slane %v336, 4
    %v1309 = vrot.slane %v337, 4
    %v1310 = vrot.slane %v338, 4
    %v1349 = vunpack.c.l.b16 %v1272
    %v1350 = vunpack.c.l.b16 %v1273
    %v1351 = vunpack.c.l.b16 %v1274
    %v1352 = vunpack.c.l.b16 %v1275
    %v1353 = vunpack.c.l.b16 %v1276
    %v1354 = vunpack.c.l.b16 %v1277
    %v1355 = vunpack.c.l.b16 %v1278
    %v1356 = vunpack.c.l.b16 %v1279
    %v1357 = vunpack.c.l.b16 %v1280
    %v1358 = vunpack.c.l.b16 %v1281
    %v1359 = vunpack.c.l.b16 %v1282
    %v1360 = vunpack.c.l.b16 %v1283
    %v1361 = vunpack.c.l.b16 %v1284
    %v1362 = vunpack.c.l.b16 %v1285
    %v1363 = vunpack.c.l.b16 %v1286
    %v1364 = vunpack.c.l.b16 %v1287
    %v1365 = vunpack.c.l.b16 %v1288
    %v1366 = vunpack.c.l.b16 %v1289
    %v1367 = vunpack.c.l.b16 %v1290
    %v1368 = vunpack.c.l.b16 %v1291
    %v1369 = vunpack.c.l.b16 %v1292
    %v1370 = vunpack.c.l.b16 %v1293
    %v1371 = vunpack.c.l.b16 %v1294
    %v1372 = vunpack.c.l.b16 %v1295
    %v1373 = vunpack.c.l.b16 %v1296
    %v1374 = vunpack.c.l.b16 %v1297
    %v1375 = vunpack.c.l.b16 %v1298
    %v1376 = vunpack.c.l.b16 %v1299
    %v1377 = vunpack.c.l.b16 %v1300
    %v1378 = vunpack.c.l.b16 %v1301
    %v1379 = vunpack.c.l.b16 %v1302
    %v1380 = vunpack.c.l.b16 %v1303
    %v1381 = vunpack.c.l.b16 %v1304
    %v1382 = vunpack.c.l.b16 %v1305
    %v1383 = vunpack.c.l.b16 %v1306
    %v1384 = vunpack.c.l.b16 %v1307
    %v1385 = vpack.c.b16 %v1350, %v1349
    %v1386 = vpack.c.b16 %v1352, %v1351
    %v1387 = vpack.c.b16 %v1354, %v1353
    %v1388 = vpack.c.b16 %v1356, %v1355
    %v1389 = vpack.c.b16 %v1358, %v1357
    %v1390 = vpack.c.b16 %v1360, %v1359
    %v1391 = vpack.c.b16 %v1362, %v1361
    %v1392 = vpack.c.b16 %v1364, %v1363
    %v1393 = vpack.c.b16 %v1366, %v1365
    %v1394 = vpack.c.b16 %v1368, %v1367
    %v1395 = vpack.c.b16 %v1370, %v1369
    %v1396 = vpack.c.b16 %v1372, %v1371
    %v1397 = vpack.c.b16 %v1374, %v1373
    %v1398 = vpack.c.b16 %v1376, %v1375
    %v1399 = vpack.c.b16 %v1378, %v1377
    %v1400 = vpack.c.b16 %v1380, %v1379
    %v1401 = vpack.c.b16 %v1382, %v1381
    %v1402 = vpack.c.b16 %v1384, %v1383
    %v1422 = vsel %vm528, %v1310, 0
    %1424 = vmatprep.subr.bf16.mxu0 0
    %1425 = vmatpush1.bf16.msra.mxu0 %v1385
    %1426 = vmatprep.subr.bf16.mxu0 0
    %1427 = vmatpush1.bf16.msra.mxu0 %v1386
    %1428 = vmatprep.subr.bf16.mxu0 0
    %1429 = vmatpush1.bf16.msra.mxu0 %v1387
    %1430 = vmatprep.subr.bf16.mxu0 0
    %1431 = vmatpush1.bf16.msra.mxu0 %v1388
    %1432 = vmatprep.subr.bf16.mxu0 0
    %1433 = vmatpush1.bf16.msra.mxu0 %v1389
    %1434 = vmatprep.subr.bf16.mxu0 0
    %1435 = vmatpush1.bf16.msra.mxu0 %v1390
    %1436 = vmatprep.subr.bf16.mxu0 0
    %1437 = vmatpush1.bf16.msra.mxu0 %v1391
    %1438 = vmatprep.subr.bf16.mxu0 0
    %1439 = vmatpush1.bf16.msra.mxu0 %v1392
    %1440 = vmatprep.subr.bf16.mxu0 0
    %1441 = vmatpush1.bf16.msra.mxu0 %v1393
    %1442 = vmatprep.subr.bf16.mxu0 0
    %1443 = vmatpush1.bf16.msra.mxu0 %v1394
    %1444 = vmatprep.subr.bf16.mxu0 0
    %1445 = vmatpush1.bf16.msra.mxu0 %v1395
    %1446 = vmatprep.subr.bf16.mxu0 0
    %1447 = vmatpush1.bf16.msra.mxu0 %v1396
    %1448 = vmatprep.subr.bf16.mxu0 0
    %1449 = vmatpush1.bf16.msra.mxu0 %v1397
    %1450 = vmatprep.subr.bf16.mxu0 0
    %1451 = vmatpush1.bf16.msra.mxu0 %v1398
    %1452 = vmatprep.subr.bf16.mxu0 0
    %1453 = vmatpush1.bf16.msra.mxu0 %v1399
    %1454 = vmatprep.subr.bf16.mxu0 0
    %1455 = vmatpush1.bf16.msra.mxu0 %v1400
    %1456 = vmatprep.mubr.bf16.mxu0 %v1309
    %1457 = vmatmul.mubr.bf16.gmra.mrb[0].mxu0 %v1308
    %v1458 = vpop.f32.mrb[0].mxu0
    %v1459 = vadd.f32 0.0, %v1458
    %v1460 = vpop.f32.mrb[0].mxu0
    %v1461 = vpop.f32.mrb[0].mxu0
    %v1462 = vpop.f32.mrb[0].mxu0
    %1463 = vdwg.mxu0
    %1464 = vmatprep.subr.bf16.mxu0 0
    %1465 = vmatpush1.bf16.msra.mxu0 %v1401
    %1466 = vmatprep.subr.bf16.mxu0 0
    %1467 = vmatpush1.bf16.msra.mxu0 %v1402
    %1468 = vmatprep.subr.bf16.mxu0 0
    %1469 = vmatpush1.bf16.msra.mxu0 0
    %1470 = vmatprep.subr.bf16.mxu0 0
    %1471 = vmatpush1.bf16.msra.mxu0 0
    %1472 = vmatprep.subr.bf16.mxu0 0
    %1473 = vmatpush1.bf16.msra.mxu0 0
    %1474 = vmatprep.subr.bf16.mxu0 0
    %1475 = vmatpush1.bf16.msra.mxu0 0
    %1476 = vmatprep.subr.bf16.mxu0 0
    %1477 = vmatpush1.bf16.msra.mxu0 0
    %1478 = vmatprep.subr.bf16.mxu0 0
    %1479 = vmatpush1.bf16.msra.mxu0 0
    %1480 = vmatprep.subr.bf16.mxu0 0
    %1481 = vmatpush1.bf16.msra.mxu0 0
    %1482 = vmatprep.subr.bf16.mxu0 0
    %1483 = vmatpush1.bf16.msra.mxu0 0
    %1484 = vmatprep.subr.bf16.mxu0 0
    %1485 = vmatpush1.bf16.msra.mxu0 0
    %1486 = vmatprep.subr.bf16.mxu0 0
    %1487 = vmatpush1.bf16.msra.mxu0 0
    %1488 = vmatprep.subr.bf16.mxu0 0
    %1489 = vmatpush1.bf16.msra.mxu0 0
    %1490 = vmatprep.subr.bf16.mxu0 0
    %1491 = vmatpush1.bf16.msra.mxu0 0
    %1492 = vmatprep.subr.bf16.mxu0 0
    %1493 = vmatpush1.bf16.msra.mxu0 0
    %1494 = vmatprep.subr.bf16.mxu0 0
    %1495 = vmatpush1.bf16.msra.mxu0 0
    %1496 = vmatprep.mubr.bf16.mxu0 0
    %1497 = vmatmul.mubr.bf16.gmra.mrb[0].mxu0 %v1422
    %v1498 = vpop.f32.mrb[0].mxu0
    %v1499 = vadd.f32 %v1459, %v1498
    %v1500 = vpop.f32.mrb[0].mxu0
    %v1501 = vpop.f32.mrb[0].mxu0
    %v1502 = vpop.f32.mrb[0].mxu0
    %1503 = vdwg.mxu0
    %v1504 = vadd.f32 %v1270, %v1499
    %s1505 = scalar_lea.vmem %s3, 720
    %v1506 = vld [vmem:[%s1505] sm:$0xf]
    %v1507 = vld [vmem:[%s1505 + $0x4] sm:$0xf]
    %v1508 = vld [vmem:[%s1505 + $0x8] sm:$0xf]
    %v1509 = vld [vmem:[%s1505 + $0xc] sm:$0xf]
    %v1510 = vld [vmem:[%s1505 + $0x10] sm:$0xf]
    %v1511 = vld [vmem:[%s1505 + $0x14] sm:$0xf]
    %v1512 = vld [vmem:[%s1505 + $0x18] sm:$0xf]
    %v1513 = vld [vmem:[%s1505 + $0x1c] sm:$0xf]
    %v1514 = vld [vmem:[%s1505 + $0x20] sm:$0xf]
    %v1515 = vld [vmem:[%s1505 + $0x24] sm:$0xf]
    %v1516 = vld [vmem:[%s1505 + $0x28] sm:$0xf]
    %v1517 = vld [vmem:[%s1505 + $0x2c] sm:$0xf]
    %v1518 = vld [vmem:[%s1505 + $0x30] sm:$0xf]
    %v1519 = vld [vmem:[%s1505 + $0x34] sm:$0xf]
    %v1520 = vld [vmem:[%s1505 + $0x38] sm:$0xf]
    %v1521 = vld [vmem:[%s1505 + $0x3c] sm:$0xf]
    %v1522 = vld [vmem:[%s1505 + $0x40] sm:$0xf]
    %v1523 = vld [vmem:[%s1505 + $0x44] sm:$0xf]
    %v1524 = vld [vmem:[%s1505 + $0x48] sm:$0xf]
    %v1525 = vld [vmem:[%s1505 + $0x4c] sm:$0xf]
    %v1526 = vld [vmem:[%s1505 + $0x50] sm:$0xf]
    %v1527 = vld [vmem:[%s1505 + $0x54] sm:$0xf]
    %v1528 = vld [vmem:[%s1505 + $0x58] sm:$0xf]
    %v1529 = vld [vmem:[%s1505 + $0x5c] sm:$0xf]
    %v1530 = vld [vmem:[%s1505 + $0x60] sm:$0xf]
    %v1531 = vld [vmem:[%s1505 + $0x64] sm:$0xf]
    %v1532 = vld [vmem:[%s1505 + $0x68] sm:$0xf]
    %v1533 = vld [vmem:[%s1505 + $0x6c] sm:$0xf]
    %v1534 = vld [vmem:[%s1505 + $0x70] sm:$0xf]
    %v1535 = vld [vmem:[%s1505 + $0x74] sm:$0xf]
    %v1536 = vld [vmem:[%s1505 + $0x78] sm:$0xf]
    %v1537 = vld [vmem:[%s1505 + $0x7c] sm:$0xf]
    %v1538 = vld [vmem:[%s1505 + $0x80] sm:$0xf]
    %v1539 = vld [vmem:[%s1505 + $0x84] sm:$0xf]
    %v1540 = vld [vmem:[%s1505 + $0x88] sm:$0xf]
    %v1541 = vld [vmem:[%s1505 + $0x8c] sm:$0xf]
    %v1542 = vrot.slane %v336, 5
    %v1543 = vrot.slane %v337, 5
    %v1544 = vrot.slane %v338, 5
    %v1583 = vunpack.c.l.b16 %v1506
    %v1584 = vunpack.c.l.b16 %v1507
    %v1585 = vunpack.c.l.b16 %v1508
    %v1586 = vunpack.c.l.b16 %v1509
    %v1587 = vunpack.c.l.b16 %v1510
    %v1588 = vunpack.c.l.b16 %v1511
    %v1589 = vunpack.c.l.b16 %v1512
    %v1590 = vunpack.c.l.b16 %v1513
    %v1591 = vunpack.c.l.b16 %v1514
    %v1592 = vunpack.c.l.b16 %v1515
    %v1593 = vunpack.c.l.b16 %v1516
    %v1594 = vunpack.c.l.b16 %v1517
    %v1595 = vunpack.c.l.b16 %v1518
    %v1596 = vunpack.c.l.b16 %v1519
    %v1597 = vunpack.c.l.b16 %v1520
    %v1598 = vunpack.c.l.b16 %v1521
    %v1599 = vunpack.c.l.b16 %v1522
    %v1600 = vunpack.c.l.b16 %v1523
    %v1601 = vunpack.c.l.b16 %v1524
    %v1602 = vunpack.c.l.b16 %v1525
    %v1603 = vunpack.c.l.b16 %v1526
    %v1604 = vunpack.c.l.b16 %v1527
    %v1605 = vunpack.c.l.b16 %v1528
    %v1606 = vunpack.c.l.b16 %v1529
    %v1607 = vunpack.c.l.b16 %v1530
    %v1608 = vunpack.c.l.b16 %v1531
    %v1609 = vunpack.c.l.b16 %v1532
    %v1610 = vunpack.c.l.b16 %v1533
    %v1611 = vunpack.c.l.b16 %v1534
    %v1612 = vunpack.c.l.b16 %v1535
    %v1613 = vunpack.c.l.b16 %v1536
    %v1614 = vunpack.c.l.b16 %v1537
    %v1615 = vunpack.c.l.b16 %v1538
    %v1616 = vunpack.c.l.b16 %v1539
    %v1617 = vunpack.c.l.b16 %v1540
    %v1618 = vunpack.c.l.b16 %v1541
    %v1619 = vpack.c.b16 %v1584, %v1583
    %v1620 = vpack.c.b16 %v1586, %v1585
    %v1621 = vpack.c.b16 %v1588, %v1587
    %v1622 = vpack.c.b16 %v1590, %v1589
    %v1623 = vpack.c.b16 %v1592, %v1591
    %v1624 = vpack.c.b16 %v1594, %v1593
    %v1625 = vpack.c.b16 %v1596, %v1595
    %v1626 = vpack.c.b16 %v1598, %v1597
    %v1627 = vpack.c.b16 %v1600, %v1599
    %v1628 = vpack.c.b16 %v1602, %v1601
    %v1629 = vpack.c.b16 %v1604, %v1603
    %v1630 = vpack.c.b16 %v1606, %v1605
    %v1631 = vpack.c.b16 %v1608, %v1607
    %v1632 = vpack.c.b16 %v1610, %v1609
    %v1633 = vpack.c.b16 %v1612, %v1611
    %v1634 = vpack.c.b16 %v1614, %v1613
    %v1635 = vpack.c.b16 %v1616, %v1615
    %v1636 = vpack.c.b16 %v1618, %v1617
    %v1656 = vsel %vm528, %v1544, 0
    %1658 = vmatprep.subr.bf16.mxu0 0
    %1659 = vmatpush1.bf16.msra.mxu0 %v1619
    %1660 = vmatprep.subr.bf16.mxu0 0
    %1661 = vmatpush1.bf16.msra.mxu0 %v1620
    %1662 = vmatprep.subr.bf16.mxu0 0
    %1663 = vmatpush1.bf16.msra.mxu0 %v1621
    %1664 = vmatprep.subr.bf16.mxu0 0
    %1665 = vmatpush1.bf16.msra.mxu0 %v1622
    %1666 = vmatprep.subr.bf16.mxu0 0
    %1667 = vmatpush1.bf16.msra.mxu0 %v1623
    %1668 = vmatprep.subr.bf16.mxu0 0
    %1669 = vmatpush1.bf16.msra.mxu0 %v1624
    %1670 = vmatprep.subr.bf16.mxu0 0
    %1671 = vmatpush1.bf16.msra.mxu0 %v1625
    %1672 = vmatprep.subr.bf16.mxu0 0
    %1673 = vmatpush1.bf16.msra.mxu0 %v1626
    %1674 = vmatprep.subr.bf16.mxu0 0
    %1675 = vmatpush1.bf16.msra.mxu0 %v1627
    %1676 = vmatprep.subr.bf16.mxu0 0
    %1677 = vmatpush1.bf16.msra.mxu0 %v1628
    %1678 = vmatprep.subr.bf16.mxu0 0
    %1679 = vmatpush1.bf16.msra.mxu0 %v1629
    %1680 = vmatprep.subr.bf16.mxu0 0
    %1681 = vmatpush1.bf16.msra.mxu0 %v1630
    %1682 = vmatprep.subr.bf16.mxu0 0
    %1683 = vmatpush1.bf16.msra.mxu0 %v1631
    %1684 = vmatprep.subr.bf16.mxu0 0
    %1685 = vmatpush1.bf16.msra.mxu0 %v1632
    %1686 = vmatprep.subr.bf16.mxu0 0
    %1687 = vmatpush1.bf16.msra.mxu0 %v1633
    %1688 = vmatprep.subr.bf16.mxu0 0
    %1689 = vmatpush1.bf16.msra.mxu0 %v1634
    %1690 = vmatprep.mubr.bf16.mxu0 %v1543
    %1691 = vmatmul.mubr.bf16.gmra.mrb[0].mxu0 %v1542
    %v1692 = vpop.f32.mrb[0].mxu0
    %v1693 = vadd.f32 0.0, %v1692
    %v1694 = vpop.f32.mrb[0].mxu0
    %v1695 = vpop.f32.mrb[0].mxu0
    %v1696 = vpop.f32.mrb[0].mxu0
    %1697 = vdwg.mxu0
    %1698 = vmatprep.subr.bf16.mxu0 0
    %1699 = vmatpush1.bf16.msra.mxu0 %v1635
    %1700 = vmatprep.subr.bf16.mxu0 0
    %1701 = vmatpush1.bf16.msra.mxu0 %v1636
    %1702 = vmatprep.subr.bf16.mxu0 0
    %1703 = vmatpush1.bf16.msra.mxu0 0
    %1704 = vmatprep.subr.bf16.mxu0 0
    %1705 = vmatpush1.bf16.msra.mxu0 0
    %1706 = vmatprep.subr.bf16.mxu0 0
    %1707 = vmatpush1.bf16.msra.mxu0 0
    %1708 = vmatprep.subr.bf16.mxu0 0
    %1709 = vmatpush1.bf16.msra.mxu0 0
    %1710 = vmatprep.subr.bf16.mxu0 0
    %1711 = vmatpush1.bf16.msra.mxu0 0
    %1712 = vmatprep.subr.bf16.mxu0 0
    %1713 = vmatpush1.bf16.msra.mxu0 0
    %1714 = vmatprep.subr.bf16.mxu0 0
    %1715 = vmatpush1.bf16.msra.mxu0 0
    %1716 = vmatprep.subr.bf16.mxu0 0
    %1717 = vmatpush1.bf16.msra.mxu0 0
    %1718 = vmatprep.subr.bf16.mxu0 0
    %1719 = vmatpush1.bf16.msra.mxu0 0
    %1720 = vmatprep.subr.bf16.mxu0 0
    %1721 = vmatpush1.bf16.msra.mxu0 0
    %1722 = vmatprep.subr.bf16.mxu0 0
    %1723 = vmatpush1.bf16.msra.mxu0 0
    %1724 = vmatprep.subr.bf16.mxu0 0
    %1725 = vmatpush1.bf16.msra.mxu0 0
    %1726 = vmatprep.subr.bf16.mxu0 0
    %1727 = vmatpush1.bf16.msra.mxu0 0
    %1728 = vmatprep.subr.bf16.mxu0 0
    %1729 = vmatpush1.bf16.msra.mxu0 0
    %1730 = vmatprep.mubr.bf16.mxu0 0
    %1731 = vmatmul.mubr.bf16.gmra.mrb[0].mxu0 %v1656
    %v1732 = vpop.f32.mrb[0].mxu0
    %v1733 = vadd.f32 %v1693, %v1732
    %v1734 = vpop.f32.mrb[0].mxu0
    %v1735 = vpop.f32.mrb[0].mxu0
    %v1736 = vpop.f32.mrb[0].mxu0
    %1737 = vdwg.mxu0
    %v1738 = vadd.f32 %v1504, %v1733
    %s1739 = scalar_lea.vmem %s3, 864
    %v1740 = vld [vmem:[%s1739] sm:$0xf]
    %v1741 = vld [vmem:[%s1739 + $0x4] sm:$0xf]
    %v1742 = vld [vmem:[%s1739 + $0x8] sm:$0xf]
    %v1743 = vld [vmem:[%s1739 + $0xc] sm:$0xf]
    %v1744 = vld [vmem:[%s1739 + $0x10] sm:$0xf]
    %v1745 = vld [vmem:[%s1739 + $0x14] sm:$0xf]
    %v1746 = vld [vmem:[%s1739 + $0x18] sm:$0xf]
    %v1747 = vld [vmem:[%s1739 + $0x1c] sm:$0xf]
    %v1748 = vld [vmem:[%s1739 + $0x20] sm:$0xf]
    %v1749 = vld [vmem:[%s1739 + $0x24] sm:$0xf]
    %v1750 = vld [vmem:[%s1739 + $0x28] sm:$0xf]
    %v1751 = vld [vmem:[%s1739 + $0x2c] sm:$0xf]
    %v1752 = vld [vmem:[%s1739 + $0x30] sm:$0xf]
    %v1753 = vld [vmem:[%s1739 + $0x34] sm:$0xf]
    %v1754 = vld [vmem:[%s1739 + $0x38] sm:$0xf]
    %v1755 = vld [vmem:[%s1739 + $0x3c] sm:$0xf]
    %v1756 = vld [vmem:[%s1739 + $0x40] sm:$0xf]
    %v1757 = vld [vmem:[%s1739 + $0x44] sm:$0xf]
    %v1758 = vld [vmem:[%s1739 + $0x48] sm:$0xf]
    %v1759 = vld [vmem:[%s1739 + $0x4c] sm:$0xf]
    %v1760 = vld [vmem:[%s1739 + $0x50] sm:$0xf]
    %v1761 = vld [vmem:[%s1739 + $0x54] sm:$0xf]
    %v1762 = vld [vmem:[%s1739 + $0x58] sm:$0xf]
    %v1763 = vld [vmem:[%s1739 + $0x5c] sm:$0xf]
    %v1764 = vld [vmem:[%s1739 + $0x60] sm:$0xf]
    %v1765 = vld [vmem:[%s1739 + $0x64] sm:$0xf]
    %v1766 = vld [vmem:[%s1739 + $0x68] sm:$0xf]
    %v1767 = vld [vmem:[%s1739 + $0x6c] sm:$0xf]
    %v1768 = vld [vmem:[%s1739 + $0x70] sm:$0xf]
    %v1769 = vld [vmem:[%s1739 + $0x74] sm:$0xf]
    %v1770 = vld [vmem:[%s1739 + $0x78] sm:$0xf]
    %v1771 = vld [vmem:[%s1739 + $0x7c] sm:$0xf]
    %v1772 = vld [vmem:[%s1739 + $0x80] sm:$0xf]
    %v1773 = vld [vmem:[%s1739 + $0x84] sm:$0xf]
    %v1774 = vld [vmem:[%s1739 + $0x88] sm:$0xf]
    %v1775 = vld [vmem:[%s1739 + $0x8c] sm:$0xf]
    %v1776 = vrot.slane %v336, 6
    %v1777 = vrot.slane %v337, 6
    %v1778 = vrot.slane %v338, 6
    %v1817 = vunpack.c.l.b16 %v1740
    %v1818 = vunpack.c.l.b16 %v1741
    %v1819 = vunpack.c.l.b16 %v1742
    %v1820 = vunpack.c.l.b16 %v1743
    %v1821 = vunpack.c.l.b16 %v1744
    %v1822 = vunpack.c.l.b16 %v1745
    %v1823 = vunpack.c.l.b16 %v1746
    %v1824 = vunpack.c.l.b16 %v1747
    %v1825 = vunpack.c.l.b16 %v1748
    %v1826 = vunpack.c.l.b16 %v1749
    %v1827 = vunpack.c.l.b16 %v1750
    %v1828 = vunpack.c.l.b16 %v1751
    %v1829 = vunpack.c.l.b16 %v1752
    %v1830 = vunpack.c.l.b16 %v1753
    %v1831 = vunpack.c.l.b16 %v1754
    %v1832 = vunpack.c.l.b16 %v1755
    %v1833 = vunpack.c.l.b16 %v1756
    %v1834 = vunpack.c.l.b16 %v1757
    %v1835 = vunpack.c.l.b16 %v1758
    %v1836 = vunpack.c.l.b16 %v1759
    %v1837 = vunpack.c.l.b16 %v1760
    %v1838 = vunpack.c.l.b16 %v1761
    %v1839 = vunpack.c.l.b16 %v1762
    %v1840 = vunpack.c.l.b16 %v1763
    %v1841 = vunpack.c.l.b16 %v1764
    %v1842 = vunpack.c.l.b16 %v1765
    %v1843 = vunpack.c.l.b16 %v1766
    %v1844 = vunpack.c.l.b16 %v1767
    %v1845 = vunpack.c.l.b16 %v1768
    %v1846 = vunpack.c.l.b16 %v1769
    %v1847 = vunpack.c.l.b16 %v1770
    %v1848 = vunpack.c.l.b16 %v1771
    %v1849 = vunpack.c.l.b16 %v1772
    %v1850 = vunpack.c.l.b16 %v1773
    %v1851 = vunpack.c.l.b16 %v1774
    %v1852 = vunpack.c.l.b16 %v1775
    %v1853 = vpack.c.b16 %v1818, %v1817
    %v1854 = vpack.c.b16 %v1820, %v1819
    %v1855 = vpack.c.b16 %v1822, %v1821
    %v1856 = vpack.c.b16 %v1824, %v1823
    %v1857 = vpack.c.b16 %v1826, %v1825
    %v1858 = vpack.c.b16 %v1828, %v1827
    %v1859 = vpack.c.b16 %v1830, %v1829
    %v1860 = vpack.c.b16 %v1832, %v1831
    %v1861 = vpack.c.b16 %v1834, %v1833
    %v1862 = vpack.c.b16 %v1836, %v1835
    %v1863 = vpack.c.b16 %v1838, %v1837
    %v1864 = vpack.c.b16 %v1840, %v1839
    %v1865 = vpack.c.b16 %v1842, %v1841
    %v1866 = vpack.c.b16 %v1844, %v1843
    %v1867 = vpack.c.b16 %v1846, %v1845
    %v1868 = vpack.c.b16 %v1848, %v1847
    %v1869 = vpack.c.b16 %v1850, %v1849
    %v1870 = vpack.c.b16 %v1852, %v1851
    %v1890 = vsel %vm528, %v1778, 0
    %1892 = vmatprep.subr.bf16.mxu0 0
    %1893 = vmatpush1.bf16.msra.mxu0 %v1853
    %1894 = vmatprep.subr.bf16.mxu0 0
    %1895 = vmatpush1.bf16.msra.mxu0 %v1854
    %1896 = vmatprep.subr.bf16.mxu0 0
    %1897 = vmatpush1.bf16.msra.mxu0 %v1855
    %1898 = vmatprep.subr.bf16.mxu0 0
    %1899 = vmatpush1.bf16.msra.mxu0 %v1856
    %1900 = vmatprep.subr.bf16.mxu0 0
    %1901 = vmatpush1.bf16.msra.mxu0 %v1857
    %1902 = vmatprep.subr.bf16.mxu0 0
    %1903 = vmatpush1.bf16.msra.mxu0 %v1858
    %1904 = vmatprep.subr.bf16.mxu0 0
    %1905 = vmatpush1.bf16.msra.mxu0 %v1859
    %1906 = vmatprep.subr.bf16.mxu0 0
    %1907 = vmatpush1.bf16.msra.mxu0 %v1860
    %1908 = vmatprep.subr.bf16.mxu0 0
    %1909 = vmatpush1.bf16.msra.mxu0 %v1861
    %1910 = vmatprep.subr.bf16.mxu0 0
    %1911 = vmatpush1.bf16.msra.mxu0 %v1862
    %1912 = vmatprep.subr.bf16.mxu0 0
    %1913 = vmatpush1.bf16.msra.mxu0 %v1863
    %1914 = vmatprep.subr.bf16.mxu0 0
    %1915 = vmatpush1.bf16.msra.mxu0 %v1864
    %1916 = vmatprep.subr.bf16.mxu0 0
    %1917 = vmatpush1.bf16.msra.mxu0 %v1865
    %1918 = vmatprep.subr.bf16.mxu0 0
    %1919 = vmatpush1.bf16.msra.mxu0 %v1866
    %1920 = vmatprep.subr.bf16.mxu0 0
    %1921 = vmatpush1.bf16.msra.mxu0 %v1867
    %1922 = vmatprep.subr.bf16.mxu0 0
    %1923 = vmatpush1.bf16.msra.mxu0 %v1868
    %1924 = vmatprep.mubr.bf16.mxu0 %v1777
    %1925 = vmatmul.mubr.bf16.gmra.mrb[0].mxu0 %v1776
    %v1926 = vpop.f32.mrb[0].mxu0
    %v1927 = vadd.f32 0.0, %v1926
    %v1928 = vpop.f32.mrb[0].mxu0
    %v1929 = vpop.f32.mrb[0].mxu0
    %v1930 = vpop.f32.mrb[0].mxu0
    %1931 = vdwg.mxu0
    %1932 = vmatprep.subr.bf16.mxu0 0
    %1933 = vmatpush1.bf16.msra.mxu0 %v1869
    %1934 = vmatprep.subr.bf16.mxu0 0
    %1935 = vmatpush1.bf16.msra.mxu0 %v1870
    %1936 = vmatprep.subr.bf16.mxu0 0
    %1937 = vmatpush1.bf16.msra.mxu0 0
    %1938 = vmatprep.subr.bf16.mxu0 0
    %1939 = vmatpush1.bf16.msra.mxu0 0
    %1940 = vmatprep.subr.bf16.mxu0 0
    %1941 = vmatpush1.bf16.msra.mxu0 0
    %1942 = vmatprep.subr.bf16.mxu0 0
    %1943 = vmatpush1.bf16.msra.mxu0 0
    %1944 = vmatprep.subr.bf16.mxu0 0
    %1945 = vmatpush1.bf16.msra.mxu0 0
    %1946 = vmatprep.subr.bf16.mxu0 0
    %1947 = vmatpush1.bf16.msra.mxu0 0
    %1948 = vmatprep.subr.bf16.mxu0 0
    %1949 = vmatpush1.bf16.msra.mxu0 0
    %1950 = vmatprep.subr.bf16.mxu0 0
    %1951 = vmatpush1.bf16.msra.mxu0 0
    %1952 = vmatprep.subr.bf16.mxu0 0
    %1953 = vmatpush1.bf16.msra.mxu0 0
    %1954 = vmatprep.subr.bf16.mxu0 0
    %1955 = vmatpush1.bf16.msra.mxu0 0
    %1956 = vmatprep.subr.bf16.mxu0 0
    %1957 = vmatpush1.bf16.msra.mxu0 0
    %1958 = vmatprep.subr.bf16.mxu0 0
    %1959 = vmatpush1.bf16.msra.mxu0 0
    %1960 = vmatprep.subr.bf16.mxu0 0
    %1961 = vmatpush1.bf16.msra.mxu0 0
    %1962 = vmatprep.subr.bf16.mxu0 0
    %1963 = vmatpush1.bf16.msra.mxu0 0
    %1964 = vmatprep.mubr.bf16.mxu0 0
    %1965 = vmatmul.mubr.bf16.gmra.mrb[0].mxu0 %v1890
    %v1966 = vpop.f32.mrb[0].mxu0
    %v1967 = vadd.f32 %v1927, %v1966
    %v1968 = vpop.f32.mrb[0].mxu0
    %v1969 = vpop.f32.mrb[0].mxu0
    %v1970 = vpop.f32.mrb[0].mxu0
    %1971 = vdwg.mxu0
    %v1972 = vadd.f32 %v1738, %v1967
    %s1973 = scalar_lea.vmem %s3, 1008
    %v1974 = vld [vmem:[%s1973] sm:$0xf]
    %v1975 = vld [vmem:[%s1973 + $0x4] sm:$0xf]
    %v1976 = vld [vmem:[%s1973 + $0x8] sm:$0xf]
    %v1977 = vld [vmem:[%s1973 + $0xc] sm:$0xf]
    %v1978 = vld [vmem:[%s1973 + $0x10] sm:$0xf]
    %v1979 = vld [vmem:[%s1973 + $0x14] sm:$0xf]
    %v1980 = vld [vmem:[%s1973 + $0x18] sm:$0xf]
    %v1981 = vld [vmem:[%s1973 + $0x1c] sm:$0xf]
    %v1982 = vld [vmem:[%s1973 + $0x20] sm:$0xf]
    %v1983 = vld [vmem:[%s1973 + $0x24] sm:$0xf]
    %v1984 = vld [vmem:[%s1973 + $0x28] sm:$0xf]
    %v1985 = vld [vmem:[%s1973 + $0x2c] sm:$0xf]
    %v1986 = vld [vmem:[%s1973 + $0x30] sm:$0xf]
    %v1987 = vld [vmem:[%s1973 + $0x34] sm:$0xf]
    %v1988 = vld [vmem:[%s1973 + $0x38] sm:$0xf]
    %v1989 = vld [vmem:[%s1973 + $0x3c] sm:$0xf]
    %v1990 = vld [vmem:[%s1973 + $0x40] sm:$0xf]
    %v1991 = vld [vmem:[%s1973 + $0x44] sm:$0xf]
    %v1992 = vld [vmem:[%s1973 + $0x48] sm:$0xf]
    %v1993 = vld [vmem:[%s1973 + $0x4c] sm:$0xf]
    %v1994 = vld [vmem:[%s1973 + $0x50] sm:$0xf]
    %v1995 = vld [vmem:[%s1973 + $0x54] sm:$0xf]
    %v1996 = vld [vmem:[%s1973 + $0x58] sm:$0xf]
    %v1997 = vld [vmem:[%s1973 + $0x5c] sm:$0xf]
    %v1998 = vld [vmem:[%s1973 + $0x60] sm:$0xf]
    %v1999 = vld [vmem:[%s1973 + $0x64] sm:$0xf]
    %v2000 = vld [vmem:[%s1973 + $0x68] sm:$0xf]
    %v2001 = vld [vmem:[%s1973 + $0x6c] sm:$0xf]
    %v2002 = vld [vmem:[%s1973 + $0x70] sm:$0xf]
    %v2003 = vld [vmem:[%s1973 + $0x74] sm:$0xf]
    %v2004 = vld [vmem:[%s1973 + $0x78] sm:$0xf]
    %v2005 = vld [vmem:[%s1973 + $0x7c] sm:$0xf]
    %v2006 = vld [vmem:[%s1973 + $0x80] sm:$0xf]
    %v2007 = vld [vmem:[%s1973 + $0x84] sm:$0xf]
    %v2008 = vld [vmem:[%s1973 + $0x88] sm:$0xf]
    %v2009 = vld [vmem:[%s1973 + $0x8c] sm:$0xf]
    %v2010 = vrot.slane %v336, 7
    %v2011 = vrot.slane %v337, 7
    %v2012 = vrot.slane %v338, 7
    %v2051 = vunpack.c.l.b16 %v1974
    %v2052 = vunpack.c.l.b16 %v1975
    %v2053 = vunpack.c.l.b16 %v1976
    %v2054 = vunpack.c.l.b16 %v1977
    %v2055 = vunpack.c.l.b16 %v1978
    %v2056 = vunpack.c.l.b16 %v1979
    %v2057 = vunpack.c.l.b16 %v1980
    %v2058 = vunpack.c.l.b16 %v1981
    %v2059 = vunpack.c.l.b16 %v1982
    %v2060 = vunpack.c.l.b16 %v1983
    %v2061 = vunpack.c.l.b16 %v1984
    %v2062 = vunpack.c.l.b16 %v1985
    %v2063 = vunpack.c.l.b16 %v1986
    %v2064 = vunpack.c.l.b16 %v1987
    %v2065 = vunpack.c.l.b16 %v1988
    %v2066 = vunpack.c.l.b16 %v1989
    %v2067 = vunpack.c.l.b16 %v1990
    %v2068 = vunpack.c.l.b16 %v1991
    %v2069 = vunpack.c.l.b16 %v1992
    %v2070 = vunpack.c.l.b16 %v1993
    %v2071 = vunpack.c.l.b16 %v1994
    %v2072 = vunpack.c.l.b16 %v1995
    %v2073 = vunpack.c.l.b16 %v1996
    %v2074 = vunpack.c.l.b16 %v1997
    %v2075 = vunpack.c.l.b16 %v1998
    %v2076 = vunpack.c.l.b16 %v1999
    %v2077 = vunpack.c.l.b16 %v2000
    %v2078 = vunpack.c.l.b16 %v2001
    %v2079 = vunpack.c.l.b16 %v2002
    %v2080 = vunpack.c.l.b16 %v2003
    %v2081 = vunpack.c.l.b16 %v2004
    %v2082 = vunpack.c.l.b16 %v2005
    %v2083 = vunpack.c.l.b16 %v2006
    %v2084 = vunpack.c.l.b16 %v2007
    %v2085 = vunpack.c.l.b16 %v2008
    %v2086 = vunpack.c.l.b16 %v2009
    %v2087 = vpack.c.b16 %v2052, %v2051
    %v2088 = vpack.c.b16 %v2054, %v2053
    %v2089 = vpack.c.b16 %v2056, %v2055
    %v2090 = vpack.c.b16 %v2058, %v2057
    %v2091 = vpack.c.b16 %v2060, %v2059
    %v2092 = vpack.c.b16 %v2062, %v2061
    %v2093 = vpack.c.b16 %v2064, %v2063
    %v2094 = vpack.c.b16 %v2066, %v2065
    %v2095 = vpack.c.b16 %v2068, %v2067
    %v2096 = vpack.c.b16 %v2070, %v2069
    %v2097 = vpack.c.b16 %v2072, %v2071
    %v2098 = vpack.c.b16 %v2074, %v2073
    %v2099 = vpack.c.b16 %v2076, %v2075
    %v2100 = vpack.c.b16 %v2078, %v2077
    %v2101 = vpack.c.b16 %v2080, %v2079
    %v2102 = vpack.c.b16 %v2082, %v2081
    %v2103 = vpack.c.b16 %v2084, %v2083
    %v2104 = vpack.c.b16 %v2086, %v2085
    %v2124 = vsel %vm528, %v2012, 0
    %2126 = vmatprep.subr.bf16.mxu0 0
    %2127 = vmatpush1.bf16.msra.mxu0 %v2087
    %2128 = vmatprep.subr.bf16.mxu0 0
    %2129 = vmatpush1.bf16.msra.mxu0 %v2088
    %2130 = vmatprep.subr.bf16.mxu0 0
    %2131 = vmatpush1.bf16.msra.mxu0 %v2089
    %2132 = vmatprep.subr.bf16.mxu0 0
    %2133 = vmatpush1.bf16.msra.mxu0 %v2090
    %2134 = vmatprep.subr.bf16.mxu0 0
    %2135 = vmatpush1.bf16.msra.mxu0 %v2091
    %2136 = vmatprep.subr.bf16.mxu0 0
    %2137 = vmatpush1.bf16.msra.mxu0 %v2092
    %2138 = vmatprep.subr.bf16.mxu0 0
    %2139 = vmatpush1.bf16.msra.mxu0 %v2093
    %2140 = vmatprep.subr.bf16.mxu0 0
    %2141 = vmatpush1.bf16.msra.mxu0 %v2094
    %2142 = vmatprep.subr.bf16.mxu0 0
    %2143 = vmatpush1.bf16.msra.mxu0 %v2095
    %2144 = vmatprep.subr.bf16.mxu0 0
    %2145 = vmatpush1.bf16.msra.mxu0 %v2096
    %2146 = vmatprep.subr.bf16.mxu0 0
    %2147 = vmatpush1.bf16.msra.mxu0 %v2097
    %2148 = vmatprep.subr.bf16.mxu0 0
    %2149 = vmatpush1.bf16.msra.mxu0 %v2098
    %2150 = vmatprep.subr.bf16.mxu0 0
    %2151 = vmatpush1.bf16.msra.mxu0 %v2099
    %2152 = vmatprep.subr.bf16.mxu0 0
    %2153 = vmatpush1.bf16.msra.mxu0 %v2100
    %2154 = vmatprep.subr.bf16.mxu0 0
    %2155 = vmatpush1.bf16.msra.mxu0 %v2101
    %2156 = vmatprep.subr.bf16.mxu0 0
    %2157 = vmatpush1.bf16.msra.mxu0 %v2102
    %2158 = vmatprep.mubr.bf16.mxu0 %v2011
    %2159 = vmatmul.mubr.bf16.gmra.mrb[0].mxu0 %v2010
    %v2160 = vpop.f32.mrb[0].mxu0
    %v2161 = vadd.f32 0.0, %v2160
    %v2162 = vpop.f32.mrb[0].mxu0
    %v2163 = vpop.f32.mrb[0].mxu0
    %v2164 = vpop.f32.mrb[0].mxu0
    %2165 = vdwg.mxu0
    %2166 = vmatprep.subr.bf16.mxu0 0
    %2167 = vmatpush1.bf16.msra.mxu0 %v2103
    %2168 = vmatprep.subr.bf16.mxu0 0
    %2169 = vmatpush1.bf16.msra.mxu0 %v2104
    %2170 = vmatprep.subr.bf16.mxu0 0
    %2171 = vmatpush1.bf16.msra.mxu0 0
    %2172 = vmatprep.subr.bf16.mxu0 0
    %2173 = vmatpush1.bf16.msra.mxu0 0
    %2174 = vmatprep.subr.bf16.mxu0 0
    %2175 = vmatpush1.bf16.msra.mxu0 0
    %2176 = vmatprep.subr.bf16.mxu0 0
    %2177 = vmatpush1.bf16.msra.mxu0 0
    %2178 = vmatprep.subr.bf16.mxu0 0
    %2179 = vmatpush1.bf16.msra.mxu0 0
    %2180 = vmatprep.subr.bf16.mxu0 0
    %2181 = vmatpush1.bf16.msra.mxu0 0
    %2182 = vmatprep.subr.bf16.mxu0 0
    %2183 = vmatpush1.bf16.msra.mxu0 0
    %2184 = vmatprep.subr.bf16.mxu0 0
    %2185 = vmatpush1.bf16.msra.mxu0 0
    %2186 = vmatprep.subr.bf16.mxu0 0
    %2187 = vmatpush1.bf16.msra.mxu0 0
    %2188 = vmatprep.subr.bf16.mxu0 0
    %2189 = vmatpush1.bf16.msra.mxu0 0
    %2190 = vmatprep.subr.bf16.mxu0 0
    %2191 = vmatpush1.bf16.msra.mxu0 0
    %2192 = vmatprep.subr.bf16.mxu0 0
    %2193 = vmatpush1.bf16.msra.mxu0 0
    %2194 = vmatprep.subr.bf16.mxu0 0
    %2195 = vmatpush1.bf16.msra.mxu0 0
    %2196 = vmatprep.subr.bf16.mxu0 0
    %2197 = vmatpush1.bf16.msra.mxu0 0
    %2198 = vmatprep.mubr.bf16.mxu0 0
    %2199 = vmatmul.mubr.bf16.gmra.mrb[0].mxu0 %v2124
    %v2200 = vpop.f32.mrb[0].mxu0
    %v2201 = vadd.f32 %v2161, %v2200
    %v2202 = vpop.f32.mrb[0].mxu0
    %v2203 = vpop.f32.mrb[0].mxu0
    %v2204 = vpop.f32.mrb[0].mxu0
    %2205 = vdwg.mxu0
    %v2206 = vadd.f32 %v1972, %v2201
    %v2207 = vld [vmem:[%s4] sm:$0x1]
    %v2209 = vlaneseq
    %v2210 = vshrl.u32 %v2209, 7
    %v2211 = vsub.s32 0, %v2210
    %v2212 = vrot.slane %v2207, %v2211
    %v2214 = vadd.f32 %v2206, %v2212
    %v2215 = vtanh.pop %v2214
    %v2216 = vld [vmem:[%s5] sm:$0xff]
    %v2217 = vld [vmem:[%s5 + $0x8] sm:$0xff]
    %v2218 = vld [vmem:[%s5 + $0x10] sm:$0xff]
    %v2219 = vld [vmem:[%s5 + $0x18] sm:$0xff]
    %v2220 = vld [vmem:[%s6] sm:$0x1]
    %v2222 = vlaneseq
    %v2223 = vshrl.u32 %v2222, 7
    %v2224 = vsub.s32 0, %v2223
    %v2225 = vrot.slane %v2220, %v2224
    %v2228 = vsel %vm528, %v2215, 0
    %2230 = vmatprep.subr.mxu0 0.0
    %2231 = vmatpush1.msra.mxu0 %v2216
    %2232 = vmatprep.subr.mxu0 0.0
    %2233 = vmatpush1.msra.mxu0 %v2217
    %2234 = vmatprep.subr.mxu0 0.0
    %2235 = vmatpush1.msra.mxu0 %v2218
    %2236 = vmatprep.subr.mxu0 0.0
    %2237 = vmatpush1.msra.mxu0 %v2219
    %2238 = vmatprep.subr.mxu0 0.0
    %2239 = vmatpush1.msra.mxu0 0.0
    %2240 = vmatprep.subr.mxu0 0.0
    %2241 = vmatpush1.msra.mxu0 0.0
    %2242 = vmatprep.subr.mxu0 0.0
    %2243 = vmatpush1.msra.mxu0 0.0
    %2244 = vmatprep.subr.mxu0 0.0
    %2245 = vmatpush1.msra.mxu0 0.0
    %2246 = vmatprep.subr.mxu0 0.0
    %2247 = vmatpush1.msra.mxu0 0.0
    %2248 = vmatprep.subr.mxu0 0.0
    %2249 = vmatpush1.msra.mxu0 0.0
    %2250 = vmatprep.subr.mxu0 0.0
    %2251 = vmatpush1.msra.mxu0 0.0
    %2252 = vmatprep.subr.mxu0 0.0
    %2253 = vmatpush1.msra.mxu0 0.0
    %2254 = vmatprep.subr.mxu0 0.0
    %2255 = vmatpush1.msra.mxu0 0.0
    %2256 = vmatprep.subr.mxu0 0.0
    %2257 = vmatpush1.msra.mxu0 0.0
    %2258 = vmatprep.subr.mxu0 0.0
    %2259 = vmatpush1.msra.mxu0 0.0
    %2260 = vmatprep.subr.mxu0 0.0
    %2261 = vmatpush1.msra.mxu0 0.0
    %2262 = vmatprep.subr.mxu0 0.0
    %2263 = vmatpush1.msra.mxu0 0.0
    %2264 = vmatprep.subr.mxu0 0.0
    %2265 = vmatpush1.msra.mxu0 0.0
    %2266 = vmatprep.subr.mxu0 0.0
    %2267 = vmatpush1.msra.mxu0 0.0
    %2268 = vmatprep.subr.mxu0 0.0
    %2269 = vmatpush1.msra.mxu0 0.0
    %2270 = vmatprep.subr.mxu0 0.0
    %2271 = vmatpush1.msra.mxu0 0.0
    %2272 = vmatprep.subr.mxu0 0.0
    %2273 = vmatpush1.msra.mxu0 0.0
    %2274 = vmatprep.subr.mxu0 0.0
    %2275 = vmatpush1.msra.mxu0 0.0
    %2276 = vmatprep.subr.mxu0 0.0
    %2277 = vmatpush1.msra.mxu0 0.0
    %2278 = vmatprep.subr.mxu0 0.0
    %2279 = vmatpush1.msra.mxu0 0.0
    %2280 = vmatprep.subr.mxu0 0.0
    %2281 = vmatpush1.msra.mxu0 0.0
    %2282 = vmatprep.subr.mxu0 0.0
    %2283 = vmatpush1.msra.mxu0 0.0
    %2284 = vmatprep.subr.mxu0 0.0
    %2285 = vmatpush1.msra.mxu0 0.0
    %2286 = vmatprep.subr.mxu0 0.0
    %2287 = vmatpush1.msra.mxu0 0.0
    %2288 = vmatprep.subr.mxu0 0.0
    %2289 = vmatpush1.msra.mxu0 0.0
    %2290 = vmatprep.subr.mxu0 0.0
    %2291 = vmatpush1.msra.mxu0 0.0
    %2292 = vmatprep.subr.mxu0 0.0
    %2293 = vmatpush1.msra.mxu0 0.0
    %2294 = vmatprep.mubr.f32.mxu0 0.0
    %2295 = vmatmul.mubr.f32.gmra.mrb[0].mxu0 %v2228
    %v2296 = vpop.f32.mrb[0].mxu0
    %v2297 = vadd.f32 %v2225, %v2296
    %v2298 = vpop.f32.mrb[0].mxu0
    %2299 = vdwg.mxu0
    %vm2300 = vcmask 9216
    %2301 = vst.msk [vmem:[#allocation2] sm:$0x3] %vm2300, %v2297
    // Predicated region
    $region30: #{network_forward.1} parent=1 // pred_check
      _
    $region31: #{network_forward.1} parent=1 // pred_check_branch
      %2303 = sbr.rel (0) target = $region33
    $region32: #{network_forward.1} parent=1 // pred_region
      %s2305 = ssub.s32 32, 32
      %2306 = vsyncadd [#allocation3], %s2305
      %s2308 = sshll.u32 [#allocation2], 4
      %s2309 = int_to_ptr.vmem [resolvable:$true] %s2308
      %2311 = dma.vmem_to_hbm [thread:$0]  %s2309, 32, %s7, [#allocation3]
    $region33: #{network_forward.1} parent=1 // pred_fallthru
      _
    // Predicated region
    $region34: #{network_forward.1} parent=1 // pred_check
      _
    $region35: #{network_forward.1} parent=1 // pred_check_branch
      %2313 = sbr.rel (0) target = $region37
    $region36: #{network_forward.1} parent=1 // pred_region
      %2314 = dma.done [#allocation3], 32
    $region37: #{network_forward.1} parent=1 // pred_fallthru
      _
    %2315 = vsyncpa [#allocation3], 1

</llo_original>
